<compile_context>
chip_gen: v7x
topology: tpu7x:2x2x1
jax: 0.10.0
libtpu: 0.0.40
codegen_flags: <defaults>
</compile_context>

<pallas_src>
import jax
import jax.numpy as jnp
from jax.experimental import pallas as pl
from jax.experimental.pallas import tpu as pltpu

LN_EPS = 1e-5  # nn.LayerNorm default


# ---------------------------------------------------------------- kernel math
def _layernorm(x, g, b):
    mu = jnp.mean(x, axis=-1, keepdims=True)
    xc = x - mu
    var = jnp.mean(xc * xc, axis=-1, keepdims=True)
    return xc * jax.lax.rsqrt(var + LN_EPS) * g + b


def make_attn_kernel(dim, heads, dim_head, n_x, n_ctx, tq, n_pad, head_chunk,
                     compute_dtype):
    """Attention for one batch element, tiled over query rows.

    Scratch:
      nx_ref : (n_pad, D)        LayerNorm(x) (+ zero pad rows), once per batch elem
      kv_ref : (n_kv, 2*inner)   K/V projection of [norm(x); context]
    """
    inner = heads * dim_head
    n_kv = n_x + n_ctx
    has_ctx = n_ctx > 0
    n_chunks = heads // head_chunk

    def kernel(*refs):
        if has_ctx:
            (x_ref, ctx_ref, g_ref, b_ref, wq_ref, wkv_hbm, wo_ref, bo_ref,
             o_ref, nx_ref, kv_ref) = refs
        else:
            (x_ref, g_ref, b_ref, wq_ref, wkv_hbm, wo_ref, bo_ref,
             o_ref, nx_ref, kv_ref) = refs

        qi = pl.program_id(1)

        # ---- per-batch prologue: LayerNorm + K/V projection, kept in VMEM ----
        @pl.when(qi == 0)
        def _():
            nx = _layernorm(x_ref[0], g_ref[...], b_ref[...]).astype(compute_dtype)
            nx_ref[0:n_x, :] = nx
            if n_pad > n_x:  # zero the padded query rows (finite, discarded later)
                nx_ref[n_x:n_pad, :] = jnp.zeros((n_pad - n_x, dim), compute_dtype)

            # wkv lives in HBM; DMA it into a scoped VMEM buffer that is released
            # right after the projection (not resident / double-buffered all kernel).
            def project_kv(wkv_vmem):
                pltpu.sync_copy(wkv_hbm, wkv_vmem)
                wkv = wkv_vmem[...]
                kv_ref[0:n_x, :] = jnp.dot(
                    nx, wkv, preferred_element_type=jnp.float32
                ).astype(compute_dtype)
                if has_ctx:
                    kv_ref[n_x:n_kv, :] = jnp.dot(
                        ctx_ref[0].astype(compute_dtype), wkv,
                        preferred_element_type=jnp.float32
                    ).astype(compute_dtype)

            pl.run_scoped(project_kv, pltpu.VMEM((dim, 2 * inner), compute_dtype))

        # ---- query tile (scale already folded into wq in the wrapper) ----
        q_start = pl.multiple_of(qi * tq, tq)
        nq = nx_ref[pl.ds(q_start, tq), :]                                # (TQ, D)
        q = jnp.dot(nq, wq_ref[...], preferred_element_type=jnp.float32)  # (TQ, inner)

        # Head-chunked attention: bounds the live sim to (head_chunk, TQ, Nkv) and
        # folds each chunk straight into the output-projection accumulator.
        out = jnp.zeros((tq, dim), jnp.float32) + bo_ref[...]
        for c in range(n_chunks):
            col0 = c * head_chunk * dim_head
            ncol = head_chunk * dim_head
            qc = q[:, col0:col0 + ncol].astype(compute_dtype)
            qc = qc.reshape(tq, head_chunk, dim_head)
            kc = kv_ref[:, col0:col0 + ncol].reshape(n_kv, head_chunk, dim_head)
            vc = kv_ref[:, inner + col0:inner + col0 + ncol]
            vc = vc.reshape(n_kv, head_chunk, dim_head)

            sim = jnp.einsum("qhd,khd->hqk", qc, kc,
                             preferred_element_type=jnp.float32)          # (hc,TQ,Nkv)
            sim = sim - jnp.max(sim, axis=-1, keepdims=True)
            p = jnp.exp(sim)
            attn = p * pl.reciprocal(jnp.sum(p, axis=-1, keepdims=True), approx=True)

            oc = jnp.einsum("hqk,khd->qhd", attn.astype(compute_dtype), vc,
                            preferred_element_type=jnp.float32)           # (TQ,hc,d)
            # TODO(synk): if MLIR shows a relayout on this lane-merge reshape, fuse
            # the head-merge into the projection by contracting (h,d) against wo
            # viewed as (hc, d, D).
            out = out + jnp.dot(oc.reshape(tq, ncol).astype(compute_dtype),
                                wo_ref[col0:col0 + ncol, :],
                                preferred_element_type=jnp.float32)

        o_ref[0] = out.astype(o_ref.dtype)

    return kernel


# ---------------------------------------------------------------- wrapper
def attention_forward(x, params, context=None, *, block_q=256,
                      compute_dtype=jnp.float32, head_chunk=None,
                      vmem_limit_bytes=None):
    """Pallas forward for xcit.Attention.  x: (B, N, D), context: (B, Nc, D) or None.

    block_q: 256 on v6e/v7x, 128 on v5e.  vmem_limit_bytes: raise for production
    shapes (e.g. ~100 MiB on v5e/v6e; keep under 64 MiB on v7x).
    """
    B, N, D = x.shape
    heads, dim_head = params["heads"], params["dim_head"]
    inner = heads * dim_head
    scale = dim_head ** -0.5
    n_ctx = 0 if context is None else context.shape[1]
    n_kv = N + n_ctx

    # Query tiling: pad N up to a multiple of tq so pipelining survives any N.
    assert block_q % 8 == 0
    tq = N if N <= block_q else block_q
    num_q = pl.cdiv(N, tq)
    n_pad = num_q * tq

    # Head-chunk size: largest divisor of heads keeping sim (hc*tq*n_kv f32) small.
    if head_chunk is None:
        head_chunk = heads
        while head_chunk > 1 and head_chunk * tq * n_kv * 4 > (8 << 20):
            head_chunk -= 1
            while heads % head_chunk:
                head_chunk -= 1
    assert heads % head_chunk == 0

    # One-time weight prep: compute dtype + softmax scale folded into wq.
    wq = (params["wq"] * scale).astype(compute_dtype)
    wkv = params["wkv"].astype(compute_dtype)
    wo = params["wo"].astype(compute_dtype)
    ln_g, ln_b, bo = params["ln_g"], params["ln_b"], params["bo"]  # keep f32

    kernel = make_attn_kernel(D, heads, dim_head, N, n_ctx, tq, n_pad,
                              head_chunk, compute_dtype)

    arrays = [x]
    in_specs = [pl.BlockSpec((1, N, D), lambda b, qi: (b, 0, 0))]  # full seq per b
    if context is not None:
        arrays.append(context)
        in_specs.append(pl.BlockSpec((1, n_ctx, D), lambda b, qi: (b, 0, 0)))

    small_weights = [ln_g, ln_b, wq]
    arrays += small_weights
    in_specs += [pl.BlockSpec(w.shape, lambda b, qi, _nd=w.ndim: (0,) * _nd)
                 for w in small_weights]

    # wkv: only read in the qi==0 prologue -> leave in HBM, DMA + release in-kernel.
    arrays.append(wkv)
    in_specs.append(pl.BlockSpec(memory_space=pl.ANY))

    tail_weights = [wo, bo]
    arrays += tail_weights
    in_specs += [pl.BlockSpec(w.shape, lambda b, qi, _nd=w.ndim: (0,) * _nd)
                 for w in tail_weights]

    compiler_kwargs = dict(dimension_semantics=("parallel", "arbitrary"))
    if vmem_limit_bytes is not None:
        compiler_kwargs["vmem_limit_bytes"] = vmem_limit_bytes

    out = pl.pallas_call(
        kernel,
        out_shape=jax.ShapeDtypeStruct((B, n_pad, D), x.dtype),
        grid=(B, num_q),
        in_specs=in_specs,
        out_specs=pl.BlockSpec((1, tq, D), lambda b, qi: (b, qi, 0)),
        scratch_shapes=[
            pltpu.VMEM((n_pad, D), compute_dtype),          # LayerNorm(x) (+pad)
            pltpu.VMEM((n_kv, 2 * inner), compute_dtype),   # K/V projections
        ],
        compiler_params=pltpu.CompilerParams(**compiler_kwargs),
    )(*arrays)
    return out if n_pad == N else out[:, :N, :]


# ---------------------------------------------------------------- params
def init_params(key, dim, heads, dim_head):
    inner = heads * dim_head
    ks = jax.random.split(key, 6)
    return dict(
        heads=heads, dim_head=dim_head,
        ln_g=1.0 + 0.1 * jax.random.normal(ks[0], (1, dim), jnp.float32),
        ln_b=0.1 * jax.random.normal(ks[1], (1, dim), jnp.float32),
        wq=0.05 * jax.random.normal(ks[2], (dim, inner), jnp.float32),
        wkv=0.05 * jax.random.normal(ks[3], (dim, 2 * inner), jnp.float32),
        wo=0.05 * jax.random.normal(ks[4], (inner, dim), jnp.float32),
        bo=0.02 * jax.random.normal(ks[5], (1, dim), jnp.float32),
    )


# ---------------------------------------------------------------- pure-JAX reference
def _ref_ln(x, g, b):
    mu = x.mean(-1, keepdims=True)
    var = ((x - mu) ** 2).mean(-1, keepdims=True)
    return (x - mu) / jnp.sqrt(var + LN_EPS) * g + b


def ref_attention(x, p, context=None):
    B, N, D = x.shape
    h, dh = p["heads"], p["dim_head"]
    inner = h * dh
    n = _ref_ln(x, p["ln_g"], p["ln_b"])
    kv_in = n if context is None else jnp.concatenate([n, context], axis=1)
    q = n @ p["wq"]
    kv = kv_in @ p["wkv"]
    k, v = kv[..., :inner], kv[..., inner:]
    split = lambda t: t.reshape(t.shape[0], t.shape[1], h, dh).transpose(0, 2, 1, 3)
    qh, kh, vh = split(q), split(k), split(v)
    sim = jnp.einsum("bhid,bhjd->bhij", qh, kh) * dh ** -0.5
    attn = jax.nn.softmax(sim, axis=-1)
    o = jnp.einsum("bhij,bhjd->bhid", attn, vh)
    o = o.transpose(0, 2, 1, 3).reshape(B, N, inner)
    return o @ p["wo"] + p["bo"]


# ---------------------------------------------------------------- main
if __name__ == "__main__":
    # TODO(synk): dropout / attention-dropout are train-time only (p=0 at inference) -> identity.
    B, N, D = 2, 8, 32
    heads, dim_head = 4, 8
    Nc = 8

    key = jax.random.PRNGKey(0)
    kx, kc, kp, kx2 = jax.random.split(key, 4)
    x = jax.random.normal(kx, (B, N, D), jnp.float32)
    ctx = jax.random.normal(kc, (B, Nc, D), jnp.float32)
    params = init_params(kp, D, heads, dim_head)

    # self-attention (context=None, module default) — f32 compute
    out = jax.block_until_ready(attention_forward(x, params))
    ref = ref_attention(x, params)
    assert jnp.allclose(out, ref, rtol=2e-3, atol=2e-3), "mismatch (no context)"

    # with extra context: K/V over [norm(x); context] — f32 compute
    out_c = jax.block_until_ready(attention_forward(x, params, context=ctx))
    ref_c = ref_attention(x, params, context=ctx)
    assert jnp.allclose(out_c, ref_c, rtol=2e-3, atol=2e-3), "mismatch (with context)"

    # query tiling with a padded tail tile + head-chunked softmax path
    x2 = jax.random.normal(kx2, (B, 12, D), jnp.float32)
    out_t = jax.block_until_ready(
        attention_forward(x2, params, context=ctx, block_q=8, head_chunk=2))
    ref_t = ref_attention(x2, params, context=ctx)
    assert jnp.allclose(out_t, ref_t, rtol=2e-3, atol=2e-3), "mismatch (tiled/padded)"

    # bf16 matmul operands, f32 accumulation (v6e/v7x fast path) — looser tolerance
    out_bf = jax.block_until_ready(
        attention_forward(x, params, context=ctx, compute_dtype=jnp.bfloat16))
    assert jnp.allclose(out_bf, ref_c, rtol=3e-2, atol=3e-2), "mismatch (bf16 compute)"

    print("KERNEL_OK")
</pallas_src>

<mosaic_0001>
module attributes {stable_mosaic.version = 11 : i64} {
  func.func @kernel(%arg0: i32, %arg1: i32, %arg2: memref<1x8x32xf32, #tpu.memory_space<vmem>>, %arg3: memref<1x32xf32, #tpu.memory_space<vmem>>, %arg4: memref<1x32xf32, #tpu.memory_space<vmem>>, %arg5: memref<32x32xf32, #tpu.memory_space<vmem>>, %arg6: memref<32x64xf32, #tpu.memory_space<any>>, %arg7: memref<32x32xf32, #tpu.memory_space<vmem>>, %arg8: memref<1x32xf32, #tpu.memory_space<vmem>>, %arg9: memref<1x8x32xf32, #tpu.memory_space<vmem>>, %arg10: memref<8x32xf32, #tpu.memory_space<vmem>>, %arg11: memref<8x64xf32, #tpu.memory_space<vmem>>) attributes {dimension_semantics = [#tpu.dimension_semantics<parallel>, #tpu.dimension_semantics<arbitrary>], iteration_bounds = array<i64: 2, 1>, scalar_prefetch = 0 : i64, scratch_operands = 2 : i64, tpu.core_type = #tpu.core_type<tc>, window_params = [{transform_indices = @transform_0, window_bounds = array<i64: 1, 8, 32>}, {pipeline_mode = #tpu.pipeline_mode<synchronous>, transform_indices = @transform_1, window_bounds = array<i64: 1, 32>}, {pipeline_mode = #tpu.pipeline_mode<synchronous>, transform_indices = @transform_2, window_bounds = array<i64: 1, 32>}, {pipeline_mode = #tpu.pipeline_mode<synchronous>, transform_indices = @transform_3, window_bounds = array<i64: 32, 32>}, {}, {pipeline_mode = #tpu.pipeline_mode<synchronous>, transform_indices = @transform_5, window_bounds = array<i64: 32, 32>}, {pipeline_mode = #tpu.pipeline_mode<synchronous>, transform_indices = @transform_6, window_bounds = array<i64: 1, 32>}, {transform_indices = @transform_7, window_bounds = array<i64: 1, 8, 32>}]} {
    %c0_i32 = arith.constant 0 : i32
    %0 = arith.cmpi eq, %arg1, %c0_i32 : i32
    %1 = arith.extui %0 : i1 to i32
    %c0_i32_0 = arith.constant 0 : i32
    %2 = arith.cmpi ne, %1, %c0_i32_0 : i32
    scf.if %2 {
      %c0_19 = arith.constant 0 : index
      %c0_20 = arith.constant 0 : index
      %c0_21 = arith.constant 0 : index
      %38 = vector.load %arg2[%c0_19, %c0_20, %c0_21] : memref<1x8x32xf32, #tpu.memory_space<vmem>>, vector<1x8x32xf32>
      %39 = vector.shape_cast %38 : vector<1x8x32xf32> to vector<8x32xf32>
      %c0_22 = arith.constant 0 : index
      %c0_23 = arith.constant 0 : index
      %40 = vector.load %arg3[%c0_22, %c0_23] : memref<1x32xf32, #tpu.memory_space<vmem>>, vector<1x32xf32>
      %c0_24 = arith.constant 0 : index
      %c0_25 = arith.constant 0 : index
      %41 = vector.load %arg4[%c0_24, %c0_25] : memref<1x32xf32, #tpu.memory_space<vmem>>, vector<1x32xf32>
      %cst_26 = arith.constant dense<0.000000e+00> : vector<8xf32>
      %42 = vector.multi_reduction <add>, %39, %cst_26 [1] : vector<8x32xf32> to vector<8xf32>
      %43 = vector.shape_cast %42 : vector<8xf32> to vector<8x1xf32>
      %cst_27 = arith.constant 3.200000e+01 : f32
      %44 = vector.broadcast %cst_27 : f32 to vector<8x1xf32>
      %45 = arith.divf %43, %44 : vector<8x1xf32>
      %46 = vector.broadcast %45 : vector<8x1xf32> to vector<8x32xf32>
      %47 = arith.subf %39, %46 : vector<8x32xf32>
      %48 = arith.mulf %47, %47 : vector<8x32xf32>
      %cst_28 = arith.constant dense<0.000000e+00> : vector<8xf32>
      %49 = vector.multi_reduction <add>, %48, %cst_28 [1] : vector<8x32xf32> to vector<8xf32>
      %50 = vector.shape_cast %49 : vector<8xf32> to vector<8x1xf32>
      %cst_29 = arith.constant 3.200000e+01 : f32
      %51 = vector.broadcast %cst_29 : f32 to vector<8x1xf32>
      %52 = arith.divf %50, %51 : vector<8x1xf32>
      %cst_30 = arith.constant 9.99999974E-6 : f32
      %53 = vector.broadcast %cst_30 : f32 to vector<8x1xf32>
      %54 = arith.addf %52, %53 : vector<8x1xf32>
      %55 = math.rsqrt %54 : vector<8x1xf32>
      %56 = vector.broadcast %55 : vector<8x1xf32> to vector<8x32xf32>
      %57 = arith.mulf %47, %56 : vector<8x32xf32>
      %58 = vector.broadcast %40 : vector<1x32xf32> to vector<8x32xf32>
      %59 = arith.mulf %57, %58 : vector<8x32xf32>
      %60 = vector.broadcast %41 : vector<1x32xf32> to vector<8x32xf32>
      %61 = arith.addf %59, %60 : vector<8x32xf32>
      %c0_31 = arith.constant 0 : index
      %c0_32 = arith.constant 0 : index
      %62 = vector.load %arg10[%c0_31, %c0_32] : memref<8x32xf32, #tpu.memory_space<vmem>>, vector<8x32xf32>
      tpu.vector_store %arg10[%c0_31, %c0_32], %61 {strides = array<i32>} : memref<8x32xf32, #tpu.memory_space<vmem>>, vector<8x32xf32>,
      "tpu.region"() ({
        %alloca = memref.alloca() : memref<32x64xf32, #tpu.memory_space<vmem>>
        "tpu.region"() ({
          %66 = tpu.sem_alloc : memref<!tpu.dma_semaphore, #tpu.memory_space<semaphore_mem>>
          tpu.enqueue_dma source(%arg6 : memref<32x64xf32, #tpu.memory_space<any>>) target(%alloca : memref<32x64xf32, #tpu.memory_space<vmem>>) target_semaphore(%66 : memref<!tpu.dma_semaphore, #tpu.memory_space<semaphore_mem>>)
          tpu.wait_dma2 semaphore(%66 : memref<!tpu.dma_semaphore, #tpu.memory_space<semaphore_mem>>) src(%arg6 : memref<32x64xf32, #tpu.memory_space<any>>) dst(%alloca : memref<32x64xf32, #tpu.memory_space<vmem>>)
          tpu.yield
        }) : () -> ()
        %c0_33 = arith.constant 0 : index
        %c0_34 = arith.constant 0 : index
        %63 = vector.load %alloca[%c0_33, %c0_34] : memref<32x64xf32, #tpu.memory_space<vmem>>, vector<32x64xf32>
        %cst_35 = arith.constant dense<0.000000e+00> : vector<8x64xf32>
        %64 = tpu.matmul %61, %63, %cst_35 {dimension_numbers = #tpu.dot_dimension_numbers<[1], [0], [0], [1], [0, 0, 1, 1], [], []>} : vector<8x32xf32>, vector<32x64xf32>, vector<8x64xf32> -> vector<8x64xf32>
        %c0_36 = arith.constant 0 : index
        %c0_37 = arith.constant 0 : index
        %65 = vector.load %arg11[%c0_36, %c0_37] : memref<8x64xf32, #tpu.memory_space<vmem>>, vector<8x64xf32>
        tpu.vector_store %arg11[%c0_36, %c0_37], %64 {strides = array<i32>} : memref<8x64xf32, #tpu.memory_space<vmem>>, vector<8x64xf32>,
        tpu.yield
      }) : () -> ()
    } else {
    }
    %c8_i32 = arith.constant 8 : i32
    %3 = arith.muli %arg1, %c8_i32 : i32
    %4 = tpu.assume_multiple %3, 8 : i32
    %5 = arith.index_cast %4 : i32 to index
    %c0 = arith.constant 0 : index
    %6 = vector.load %arg10[%5, %c0] : memref<8x32xf32, #tpu.memory_space<vmem>>, vector<8x32xf32>
    %c0_1 = arith.constant 0 : index
    %c0_2 = arith.constant 0 : index
    %7 = vector.load %arg5[%c0_1, %c0_2] : memref<32x32xf32, #tpu.memory_space<vmem>>, vector<32x32xf32>
    %cst = arith.constant dense<0.000000e+00> : vector<8x32xf32>
    %8 = tpu.matmul %6, %7, %cst {dimension_numbers = #tpu.dot_dimension_numbers<[1], [0], [0], [1], [0, 0, 1, 1], [], []>} : vector<8x32xf32>, vector<32x32xf32>, vector<8x32xf32> -> vector<8x32xf32>
    %cst_3 = arith.constant 0.000000e+00 : f32
    %9 = vector.broadcast %cst_3 : f32 to vector<8x32xf32>
    %c0_4 = arith.constant 0 : index
    %c0_5 = arith.constant 0 : index
    %10 = vector.load %arg8[%c0_4, %c0_5] : memref<1x32xf32, #tpu.memory_space<vmem>>, vector<1x32xf32>
    %11 = vector.broadcast %10 : vector<1x32xf32> to vector<8x32xf32>
    %12 = arith.addf %9, %11 : vector<8x32xf32>
    %13 = vector.shape_cast %8 : vector<8x32xf32> to vector<8x4x8xf32>
    %c0_6 = arith.constant 0 : index
    %c0_7 = arith.constant 0 : index
    %14 = vector.load %arg11[%c0_6, %c0_7] : memref<8x64xf32, #tpu.memory_space<vmem>>, vector<8x32xf32>
    %15 = vector.shape_cast %14 : vector<8x32xf32> to vector<8x4x8xf32>
    %c0_8 = arith.constant 0 : index
    %c32 = arith.constant 32 : index
    %16 = vector.load %arg11[%c0_8, %c32] : memref<8x64xf32, #tpu.memory_space<vmem>>, vector<8x32xf32>
    %17 = vector.shape_cast %16 : vector<8x32xf32> to vector<8x4x8xf32>
    "tpu.trace_start"() <{level = 10 : i32, message = "qhd,khd->hqk"}> : () -> ()
    %cst_9 = arith.constant dense<0.000000e+00> : vector<4x8x8xf32>
    %18 = tpu.matmul %13, %15, %cst_9 {dimension_numbers = #tpu.dot_dimension_numbers<[2], [2], [0], [0], [0, 1, 0, 0, 1, 0], [1], [1]>} : vector<8x4x8xf32>, vector<8x4x8xf32>, vector<4x8x8xf32> -> vector<4x8x8xf32>
    "tpu.trace_stop"() : () -> ()
    %cst_10 = arith.constant dense<0xFF800000> : vector<4x8xf32>
    %19 = vector.multi_reduction <maximumf>, %18, %cst_10 [2] : vector<4x8x8xf32> to vector<4x8xf32>
    %20 = vector.shape_cast %19 : vector<4x8xf32> to vector<4x8x1xf32>
    %21 = vector.broadcast %20 : vector<4x8x1xf32> to vector<4x8x8xf32>
    %22 = arith.subf %18, %21 : vector<4x8x8xf32>
    %23 = math.exp %22 : vector<4x8x8xf32>
    %cst_11 = arith.constant dense<0.000000e+00> : vector<4x8xf32>
    %24 = vector.multi_reduction <add>, %23, %cst_11 [2] : vector<4x8x8xf32> to vector<4x8xf32>
    %25 = vector.shape_cast %24 : vector<4x8xf32> to vector<4x8x1xf32>
    %26 = tpu.reciprocal %25 {approx = true} : vector<4x8x1xf32> -> vector<4x8x1xf32>
    %27 = vector.broadcast %26 : vector<4x8x1xf32> to vector<4x8x8xf32>
    %28 = arith.mulf %23, %27 : vector<4x8x8xf32>
    "tpu.trace_start"() <{level = 10 : i32, message = "hqk,khd->qhd"}> : () -> ()
    %cst_12 = arith.constant dense<0.000000e+00> : vector<4x8x8xf32>
    %29 = tpu.matmul %17, %28, %cst_12 {dimension_numbers = #tpu.dot_dimension_numbers<[0], [2], [2], [1], [0, 1, 0, 2, 1, 1], [1], [0]>} : vector<8x4x8xf32>, vector<4x8x8xf32>, vector<4x8x8xf32> -> vector<4x8x8xf32>
    %30 = tpu.transpose %29, [2, 0, 1] : vector<4x8x8xf32> -> vector<8x4x8xf32>
    "tpu.trace_stop"() : () -> ()
    %31 = vector.shape_cast %30 : vector<8x4x8xf32> to vector<8x32xf32>
    %c0_13 = arith.constant 0 : index
    %c0_14 = arith.constant 0 : index
    %32 = vector.load %arg7[%c0_13, %c0_14] : memref<32x32xf32, #tpu.memory_space<vmem>>, vector<32x32xf32>
    %cst_15 = arith.constant dense<0.000000e+00> : vector<8x32xf32>
    %33 = tpu.matmul %31, %32, %cst_15 {dimension_numbers = #tpu.dot_dimension_numbers<[1], [0], [0], [1], [0, 0, 1, 1], [], []>} : vector<8x32xf32>, vector<32x32xf32>, vector<8x32xf32> -> vector<8x32xf32>
    %34 = arith.addf %12, %33 : vector<8x32xf32>
    %c0_16 = arith.constant 0 : index
    %c0_17 = arith.constant 0 : index
    %c0_18 = arith.constant 0 : index
    %35 = vector.load %arg9[%c0_16, %c0_17, %c0_18] : memref<1x8x32xf32, #tpu.memory_space<vmem>>, vector<1x8x32xf32>
    %36 = vector.shape_cast %35 : vector<1x8x32xf32> to vector<8x32xf32>
    %37 = vector.shape_cast %34 : vector<8x32xf32> to vector<1x8x32xf32>
    tpu.vector_store %arg9[%c0_16, %c0_17, %c0_18], %37 {strides = array<i32>} : memref<1x8x32xf32, #tpu.memory_space<vmem>>, vector<1x8x32xf32>,
    return
  }
  func.func @transform_0(%arg0: i32, %arg1: i32) -> (i32, i32, i32) {
    %c0_i32 = arith.constant 0 : i32
    %c0_i32_0 = arith.constant 0 : i32
    %c0_i32_1 = arith.constant 0 : i32
    return %arg0, %c0_i32, %c0_i32_0 : i32, i32, i32
  }
  func.func @transform_1(%arg0: i32, %arg1: i32) -> (i32, i32) {
    %c0_i32 = arith.constant 0 : i32
    %c0_i32_0 = arith.constant 0 : i32
    %c0_i32_1 = arith.constant 0 : i32
    return %c0_i32, %c0_i32_0 : i32, i32
  }
  func.func @transform_2(%arg0: i32, %arg1: i32) -> (i32, i32) {
    %c0_i32 = arith.constant 0 : i32
    %c0_i32_0 = arith.constant 0 : i32
    %c0_i32_1 = arith.constant 0 : i32
    return %c0_i32, %c0_i32_0 : i32, i32
  }
  func.func @transform_3(%arg0: i32, %arg1: i32) -> (i32, i32) {
    %c0_i32 = arith.constant 0 : i32
    %c0_i32_0 = arith.constant 0 : i32
    %c0_i32_1 = arith.constant 0 : i32
    return %c0_i32, %c0_i32_0 : i32, i32
  }
  func.func @transform_5(%arg0: i32, %arg1: i32) -> (i32, i32) {
    %c0_i32 = arith.constant 0 : i32
    %c0_i32_0 = arith.constant 0 : i32
    %c0_i32_1 = arith.constant 0 : i32
    return %c0_i32, %c0_i32_0 : i32, i32
  }
  func.func @transform_6(%arg0: i32, %arg1: i32) -> (i32, i32) {
    %c0_i32 = arith.constant 0 : i32
    %c0_i32_0 = arith.constant 0 : i32
    %c0_i32_1 = arith.constant 0 : i32
    return %c0_i32, %c0_i32_0 : i32, i32
  }
  func.func @transform_7(%arg0: i32, %arg1: i32) -> (i32, i32, i32) {
    %c0_i32 = arith.constant 0 : i32
    %c0_i32_0 = arith.constant 0 : i32
    return %arg0, %arg1, %c0_i32 : i32, i32, i32
  }
}

</mosaic_0001>

<llo_original>
// kernel: tpu_custom_call.1
$region0: #{tpu_custom_call.1}
  #allocation0 [shape = 'u32[]', space=smem, size = 0x4, offset = 0x4, fixed_abs, tag = 'smem constant byte address 0x4 - core index']
  #allocation1 [shape = 'u32[144,128]{1,0:T(1,128)}', space=vmem, size = 0x12000, scoped, tag = 'internal scratch']
  #allocation2 [shape = 'f32[8,32]{1,0:T(8,128)}', space=vmem, size = 0x1000, scoped, tag = 'scratch operand']
  #allocation3 [shape = 'f32[8,64]{1,0:T(8,128)}', space=vmem, size = 0x1000, scoped, tag = 'scratch operand']
  #allocation13 [shape = 's32[]', space=sflag, size = 0x4, offset = 0, fixed_abs, tag = 'sflag constant byte address 0x0 - dummy sync flag']
  #allocation14 [shape = 's32[]', space=sflag, size = 0x4, offset = 0, fixed_abs, tag = 'sflag constant byte address 0x0 - dummy sync flag']
  #allocation15 [shape = 'u32[]', space=smem, size = 0x4, offset = 0x44, fixed_abs, tag = 'smem constant byte address 0x44 - assertion arg 0']
  #allocation16 [shape = 'u32[]', space=smem, size = 0x4, offset = 0x48, fixed_abs, tag = 'smem constant byte address 0x48 - assertion arg 1']
  %s0 = inlined_call_operand.hbm [shape: f32[2,8,32], index: 0, kind: input, shape index: {}]
  %s1 = inlined_call_operand.vmem [shape: f32[1,32], index: 1, kind: input, shape index: {}]
  %s2 = inlined_call_operand.vmem [shape: f32[1,32], index: 2, kind: input, shape index: {}]
  %s3 = inlined_call_operand.hbm [shape: f32[32,32], index: 3, kind: input, shape index: {}]
  %s4 = inlined_call_operand.hbm [shape: f32[32,64], index: 4, kind: input, shape index: {}]
  %s5 = inlined_call_operand.hbm [shape: f32[32,32], index: 5, kind: input, shape index: {}]
  %s6 = inlined_call_operand.vmem [shape: f32[1,32], index: 6, kind: input, shape index: {}]
  %s7 = inlined_call_operand.hbm [shape: f32[2,8,32], index: 7, kind: output, shape index: {}]
  %s8 = sld [smem:[#allocation0]]
  $region79: #{tpu_custom_call.1} parent=0
    _
  %s10 = ssub.s32 1, %s8
  %s11 = scalar_select 0, %s10, %s8
  $region1: #{tpu_custom_call.1} parent=0
    #allocation4 [shape = 'u8[8192]{0}', space=vmem, size = 0x2000, scoped, tag = 'input window, operand 0']
    #allocation5 [shape = 's32[2]{0}', space=sflag, size = 0x8, scoped, tag = 'scoped memory for tpu_custom_call.1']
    #allocation6 [shape = 's32[2]{0}', space=sflag, size = 0x8, scoped, tag = 'scoped memory for tpu_custom_call.1']
    #allocation7 [shape = 'u8[16384]{0}', space=vmem, size = 0x4000, scoped, tag = 'input window, operand 3, single buffered']
    #allocation8 [shape = 's32[1]{0}', space=sflag, size = 0x4, scoped, tag = 'scoped memory for tpu_custom_call.1']
    #allocation9 [shape = 'u8[16384]{0}', space=vmem, size = 0x4000, scoped, tag = 'input window, operand 5, single buffered']
    #allocation10 [shape = 'u8[8192]{0}', space=vmem, size = 0x2000, scoped, tag = 'output window, operand 0']
    %12 = vsyncpa [#allocation5], 0
    %s13 = scalar_lea.sflag [#allocation5], 1
    %14 = vsyncpa %s13, 0
    %15 = vsyncpa [#allocation8], 0
    %16 = vsyncpa [#allocation6], 0
    %s17 = scalar_lea.sflag [#allocation6], 1
    %18 = vsyncpa %s17, 0
    loop: start=0, step=1, limit=4
    $region2: #{tpu_custom_call.1} parent=1 // loop_pre_header
      _
    $region3: #{tpu_custom_call.1} parent=1 // loop_header
      %s20 = sphi 0, %s24
      %p21 = scmp.ge.s32.totalorder %s20, 4
      %s27 = sphi 0, %s39
      %s28 = sphi 0, %s35
      %s29 = sphi 0, %s27
      %s30 = sphi 0, %s28
      %s31 = sphi 0, %s29
      %s32 = sphi 0, %s30
      %s42 = sphi 0, %s44
      %s45 = sphi 0, %s42
      %s46 = sphi 0, %s45
      %s62 = sphi 0, %s46
      %s66 = sphi 0, %s66
      %s68 = sphi 0, %s66
      %s69 = sphi 0, %s68
      %s83 = sphi 0, %s69
      %s87 = sphi 0, %s87
      %s89 = sphi 0, %s87
      %s90 = sphi 0, %s89
      %s104 = sphi 0, %s90
      %s108 = sphi 0, %s108
      %s110 = sphi 0, %s108
      %s111 = sphi 0, %s110
      %s125 = sphi 0, %s111
      %s129 = sphi 0, %s129
      %s131 = sphi 0, %s129
      %s132 = sphi 0, %s131
      %s146 = sphi 0, %s132
      %s150 = sphi 0, %s150
      %s152 = sphi 0, %s150
      %s153 = sphi 0, %s152
      %s167 = sphi 0, %s153
      %s175 = sphi 0, %s177
      %s178 = sphi 0, %s175
      %s179 = sphi 0, %s178
      %s195 = sphi 0, %s179
    $region4: #{tpu_custom_call.1} parent=1 // loop_header_branch
      %23 = sbr.rel (%p21) target = $region8
    $region5: #{tpu_custom_call.1} parent=1 // loop_body
      %s25 = ssub.s32 %s20, 1
      %s26 = ssub.s32 %s20, 2
      %s33 = sadd.s32 1, %s28
      %p34 = scmp.ge.s32.totalorder %s33, 1
      %s35 = scalar_select %p34, 0, %s33
      %s36 = sadd.s32 1, %s27
      %s37 = scalar_select %p34, %s36, %s27
      %p38 = scmp.ge.s32.totalorder %s37, 2
      %s39 = scalar_select %p38, 0, %s37
      %s40 = ssub.s32 %s27, %s39
      %p41 = scmp.eq.s32.totalorder %s40, 0
      %s43 = sadd.s32 %s42, 1
      %s44 = scalar_select %p41, %s42, %s43
      %p47 = pneg %p41
      %p48 = scmp.eq.s32.totalorder %s20, 1
      %p49 = por %p47, %p48
      %p50 = scmp.ne.s32.totalorder %s42, %s45
      %p51 = scmp.eq.s32.totalorder %s20, 0
      %p52 = por %p50, %p51
      %p53 = scmp.ne.s32.totalorder %s42, %s45
      %p54 = scmp.eq.s32.totalorder %s25, 1
      %p55 = por %p53, %p54
      %p56 = scmp.ne.s32.totalorder %s45, %s46
      %p57 = scmp.eq.s32.totalorder %s25, 0
      %p58 = por %p56, %p57
      %p59 = scmp.ne.s32.totalorder %s45, %s46
      %p60 = scmp.eq.s32.totalorder %s26, 1
      %p61 = por %p59, %p60
      %p63 = scmp.ne.s32.totalorder %s46, %s62
      %p64 = scmp.eq.s32.totalorder %s26, 0
      %p65 = por %p63, %p64
      %s67 = sadd.s32 %s66, 1
      %p70 = scmp.eq.s32.totalorder %s20, 1
      %p71 = scmp.ne.s32.totalorder %s66, %s68
      %p72 = scmp.eq.s32.totalorder %s20, 0
      %p73 = por %p71, %p72
      %p74 = scmp.ne.s32.totalorder %s66, %s68
      %p75 = scmp.eq.s32.totalorder %s25, 1
      %p76 = por %p74, %p75
      %p77 = scmp.ne.s32.totalorder %s68, %s69
      %p78 = scmp.eq.s32.totalorder %s25, 0
      %p79 = por %p77, %p78
      %p80 = scmp.ne.s32.totalorder %s68, %s69
      %p81 = scmp.eq.s32.totalorder %s26, 1
      %p82 = por %p80, %p81
      %p84 = scmp.ne.s32.totalorder %s69, %s83
      %p85 = scmp.eq.s32.totalorder %s26, 0
      %p86 = por %p84, %p85
      %s88 = sadd.s32 %s87, 1
      %p91 = scmp.eq.s32.totalorder %s20, 1
      %p92 = scmp.ne.s32.totalorder %s87, %s89
      %p93 = scmp.eq.s32.totalorder %s20, 0
      %p94 = por %p92, %p93
      %p95 = scmp.ne.s32.totalorder %s87, %s89
      %p96 = scmp.eq.s32.totalorder %s25, 1
      %p97 = por %p95, %p96
      %p98 = scmp.ne.s32.totalorder %s89, %s90
      %p99 = scmp.eq.s32.totalorder %s25, 0
      %p100 = por %p98, %p99
      %p101 = scmp.ne.s32.totalorder %s89, %s90
      %p102 = scmp.eq.s32.totalorder %s26, 1
      %p103 = por %p101, %p102
      %p105 = scmp.ne.s32.totalorder %s90, %s104
      %p106 = scmp.eq.s32.totalorder %s26, 0
      %p107 = por %p105, %p106
      %s109 = sadd.s32 %s108, 1
      %p112 = scmp.eq.s32.totalorder %s20, 1
      %p113 = scmp.ne.s32.totalorder %s108, %s110
      %p114 = scmp.eq.s32.totalorder %s20, 0
      %p115 = por %p113, %p114
      %p116 = scmp.ne.s32.totalorder %s108, %s110
      %p117 = scmp.eq.s32.totalorder %s25, 1
      %p118 = por %p116, %p117
      %p119 = scmp.ne.s32.totalorder %s110, %s111
      %p120 = scmp.eq.s32.totalorder %s25, 0
      %p121 = por %p119, %p120
      %p122 = scmp.ne.s32.totalorder %s110, %s111
      %p123 = scmp.eq.s32.totalorder %s26, 1
      %p124 = por %p122, %p123
      %p126 = scmp.ne.s32.totalorder %s111, %s125
      %p127 = scmp.eq.s32.totalorder %s26, 0
      %p128 = por %p126, %p127
      %s130 = sadd.s32 %s129, 1
      %p133 = scmp.eq.s32.totalorder %s20, 1
      %p134 = scmp.ne.s32.totalorder %s129, %s131
      %p135 = scmp.eq.s32.totalorder %s20, 0
      %p136 = por %p134, %p135
      %p137 = scmp.ne.s32.totalorder %s129, %s131
      %p138 = scmp.eq.s32.totalorder %s25, 1
      %p139 = por %p137, %p138
      %p140 = scmp.ne.s32.totalorder %s131, %s132
      %p141 = scmp.eq.s32.totalorder %s25, 0
      %p142 = por %p140, %p141
      %p143 = scmp.ne.s32.totalorder %s131, %s132
      %p144 = scmp.eq.s32.totalorder %s26, 1
      %p145 = por %p143, %p144
      %p147 = scmp.ne.s32.totalorder %s132, %s146
      %p148 = scmp.eq.s32.totalorder %s26, 0
      %p149 = por %p147, %p148
      %s151 = sadd.s32 %s150, 1
      %p154 = scmp.eq.s32.totalorder %s20, 1
      %p155 = scmp.ne.s32.totalorder %s150, %s152
      %p156 = scmp.eq.s32.totalorder %s20, 0
      %p157 = por %p155, %p156
      %p158 = scmp.ne.s32.totalorder %s150, %s152
      %p159 = scmp.eq.s32.totalorder %s25, 1
      %p160 = por %p158, %p159
      %p161 = scmp.ne.s32.totalorder %s152, %s153
      %p162 = scmp.eq.s32.totalorder %s25, 0
      %p163 = por %p161, %p162
      %p164 = scmp.ne.s32.totalorder %s152, %s153
      %p165 = scmp.eq.s32.totalorder %s26, 1
      %p166 = por %p164, %p165
      %p168 = scmp.ne.s32.totalorder %s153, %s167
      %p169 = scmp.eq.s32.totalorder %s26, 0
      %p170 = por %p168, %p169
      %s171 = ssub.s32 %s27, %s39
      %s172 = ssub.s32 %s28, %s35
      %s173 = sor.u32 %s171, %s172
      %p174 = scmp.eq.s32.totalorder %s173, 0
      %s176 = sadd.s32 %s175, 1
      %s177 = scalar_select %p174, %s175, %s176
      %p180 = pneg %p174
      %p181 = scmp.eq.s32.totalorder %s20, 1
      %p182 = por %p180, %p181
      %p183 = scmp.ne.s32.totalorder %s175, %s178
      %p184 = scmp.eq.s32.totalorder %s20, 0
      %p185 = por %p183, %p184
      %p186 = scmp.ne.s32.totalorder %s175, %s178
      %p187 = scmp.eq.s32.totalorder %s25, 1
      %p188 = por %p186, %p187
      %p189 = scmp.ne.s32.totalorder %s178, %s179
      %p190 = scmp.eq.s32.totalorder %s25, 0
      %p191 = por %p189, %p190
      %p192 = scmp.ne.s32.totalorder %s178, %s179
      %p193 = scmp.eq.s32.totalorder %s26, 1
      %p194 = por %p192, %p193
      %p196 = scmp.ne.s32.totalorder %s179, %s195
      %p197 = scmp.eq.s32.totalorder %s26, 0
      %p198 = por %p196, %p197
      %p199 = scmp.le.s32.totalorder 1, %s20
      %p200 = scmp.lt.s32.totalorder %s20, 3
      %p201 = pnand %p199, %p200
      %p202 = pneg %p201
      // Predicated region
      $region9: #{tpu_custom_call.1} parent=5 // pred_check
        _
      $region10: #{tpu_custom_call.1} parent=5 // pred_check_branch
        %204 = sbr.rel (%p201) target = $region12
      $region11: #{tpu_custom_call.1} parent=5 // pred_region
        %s205 = ssub.s32 %s20, 1
        // Predicated region
        $region13: #{tpu_custom_call.1} parent=11 // pred_check
          %p206 = pneg %p79
        $region14: #{tpu_custom_call.1} parent=11 // pred_check_branch
          %208 = sbr.rel (%p206) target = $region16
        $region15: #{tpu_custom_call.1} parent=11 // pred_region
          _
        $region16: #{tpu_custom_call.1} parent=11 // pred_fallthru
          _
        // Predicated region
        $region17: #{tpu_custom_call.1} parent=11 // pred_check
          %p209 = pneg %p100
        $region18: #{tpu_custom_call.1} parent=11 // pred_check_branch
          %211 = sbr.rel (%p209) target = $region20
        $region19: #{tpu_custom_call.1} parent=11 // pred_region
          _
        $region20: #{tpu_custom_call.1} parent=11 // pred_fallthru
          _
        // Predicated region
        $region21: #{tpu_custom_call.1} parent=11 // pred_check
          %p212 = pneg %p121
        $region22: #{tpu_custom_call.1} parent=11 // pred_check_branch
          %214 = sbr.rel (%p212) target = $region24
        $region23: #{tpu_custom_call.1} parent=11 // pred_region
          %s216 = ssub.s32 512, 512
          %217 = vsyncadd [#allocation8], %s216
          %s218 = sshll.u32 [#allocation7], 4
          %s219 = int_to_ptr.vmem [resolvable:$true] %s218
          %224 = dma.hbm_to_vmem [thread:$0]  %s3, 512, %s219, [#allocation8], 128, 128, 8
        $region24: #{tpu_custom_call.1} parent=11 // pred_fallthru
          _
        // Predicated region
        $region25: #{tpu_custom_call.1} parent=11 // pred_check
          %p225 = pneg %p142
        $region26: #{tpu_custom_call.1} parent=11 // pred_check_branch
          %227 = sbr.rel (%p225) target = $region28
        $region27: #{tpu_custom_call.1} parent=11 // pred_region
          %s229 = ssub.s32 512, 512
          %230 = vsyncadd [#allocation8], %s229
          %s231 = sshll.u32 [#allocation9], 4
          %s232 = int_to_ptr.vmem [resolvable:$true] %s231
          %237 = dma.hbm_to_vmem [thread:$0]  %s5, 512, %s232, [#allocation8], 128, 128, 8
        $region28: #{tpu_custom_call.1} parent=11 // pred_fallthru
          _
        // Predicated region
        $region29: #{tpu_custom_call.1} parent=11 // pred_check
          %p238 = pneg %p163
        $region30: #{tpu_custom_call.1} parent=11 // pred_check_branch
          %240 = sbr.rel (%p238) target = $region32
        $region31: #{tpu_custom_call.1} parent=11 // pred_region
          _
        $region32: #{tpu_custom_call.1} parent=11 // pred_fallthru
          _
      $region12: #{tpu_custom_call.1} parent=5 // pred_fallthru
        _
      %p241 = scmp.lt.s32.totalorder %s20, 2
      // Predicated region
      $region33: #{tpu_custom_call.1} parent=5 // pred_check
        %p242 = pneg %p241
      $region34: #{tpu_custom_call.1} parent=5 // pred_check_branch
        %244 = sbr.rel (%p242) target = $region36
      $region35: #{tpu_custom_call.1} parent=5 // pred_region
        // Predicated region
        $region37: #{tpu_custom_call.1} parent=35 // pred_check
          %p245 = pneg %p52
        $region38: #{tpu_custom_call.1} parent=35 // pred_check_branch
          %247 = sbr.rel (%p245) target = $region40
        $region39: #{tpu_custom_call.1} parent=35 // pred_region
          %s248 = sand.u32 %s42, 1
          %s249 = scalar_lea.sflag [#allocation5], %s248
          %s250 = sand.u32 %s42, 1
          %s251 = smul.addr %s250, 8
          %s252 = scalar_lea.vmem [#allocation4], %s251
          %s254 = ssub.s32 128, 128
          %255 = vsyncadd %s249, %s254
          %s256 = smul.addr %s27, 128
          %s257 = scalar_lea.hbm %s0, %s256
          %s259 = sshll.u32 %s252, 4
          %s260 = int_to_ptr.vmem [resolvable:$true] %s259
          %262 = dma.hbm_to_vmem [thread:$0]  %s257, 128, %s260, %s249
        $region40: #{tpu_custom_call.1} parent=35 // pred_fallthru
          _
      $region36: #{tpu_custom_call.1} parent=5 // pred_fallthru
        _
      %p263 = scmp.le.s32.totalorder 1, %s20
      %p264 = scmp.lt.s32.totalorder %s20, 3
      %p265 = pnand %p263, %p264
      %p266 = pneg %p265
      // Predicated region
      $region41: #{tpu_custom_call.1} parent=5 // pred_check
        _
      $region42: #{tpu_custom_call.1} parent=5 // pred_check_branch
        %268 = sbr.rel (%p265) target = $region44
      $region43: #{tpu_custom_call.1} parent=5 // pred_region
        %s269 = ssub.s32 %s20, 1
        %s270 = sand.u32 %s45, 1
        %s271 = scalar_lea.sflag [#allocation5], %s270
        %s272 = sand.u32 %s45, 1
        %s273 = smul.addr %s272, 8
        %s274 = scalar_lea.vmem [#allocation4], %s273
        // Predicated region
        $region45: #{tpu_custom_call.1} parent=43 // pred_check
          %p275 = pneg %p58
        $region46: #{tpu_custom_call.1} parent=43 // pred_check_branch
          %277 = sbr.rel (%p275) target = $region48
        $region47: #{tpu_custom_call.1} parent=43 // pred_region
          %278 = dma.done %s271, 128
        $region48: #{tpu_custom_call.1} parent=43 // pred_fallthru
          _
        // Predicated region
        $region49: #{tpu_custom_call.1} parent=43 // pred_check
          %p279 = pneg %p121
        $region50: #{tpu_custom_call.1} parent=43 // pred_check_branch
          %281 = sbr.rel (%p279) target = $region52
        $region51: #{tpu_custom_call.1} parent=43 // pred_region
          %282 = dma.done [#allocation8], 512
        $region52: #{tpu_custom_call.1} parent=43 // pred_fallthru
          _
        // Predicated region
        $region53: #{tpu_custom_call.1} parent=43 // pred_check
          %p283 = pneg %p142
        $region54: #{tpu_custom_call.1} parent=43 // pred_check_branch
          %285 = sbr.rel (%p283) target = $region56
        $region55: #{tpu_custom_call.1} parent=43 // pred_region
          %286 = dma.done [#allocation8], 512
        $region56: #{tpu_custom_call.1} parent=43 // pred_fallthru
          _
        %s287 = sand.u32 %s45, 1
        %s288 = scalar_lea.sflag [#allocation5], %s287
        %s289 = sand.u32 %s45, 1
        %s290 = smul.addr %s289, 8
        %s291 = scalar_lea.vmem [#allocation4], %s290
        %p292 = pneg %p58
        %p293 = pneg %p55
        %p294 = pneg %p79
        %p295 = pneg %p76
        %p296 = pneg %p100
        %p297 = pneg %p97
        %p298 = pneg %p121
        %p299 = pneg %p118
        %p300 = pneg %p142
        %p301 = pneg %p139
        %p302 = pneg %p163
        %p303 = pneg %p160
        %p304 = pneg %p191
        %p305 = pneg %p188
        %s306 = sand.u32 %s178, 1
        %s307 = scalar_lea.sflag [#allocation6], %s306
        %s308 = sand.u32 %s178, 1
        %s309 = smul.addr %s308, 8
        %s310 = scalar_lea.vmem [#allocation10], %s309
        %p311 = scmp.eq.s32.totalorder %s30, 0
        // Predicated region
        $region57: #{tpu_custom_call.1} parent=43 // pred_check
          %p312 = pneg %p311
        $region58: #{tpu_custom_call.1} parent=43 // pred_check_branch
          %314 = sbr.rel (%p312) target = $region60
        $region59: #{tpu_custom_call.1} parent=43 // pred_region
          %v315 = vld [vmem:[%s274] sm:$0xff]
          %v316 = vld [vmem:[%s1] sm:$0x1]
          %v317 = vld [vmem:[%s2] sm:$0x1]
          %vm318 = vcmask 261120
          %v319 = vsel %vm318, %v315, 0.0
          %320 = vadd.xlane.f32.xlu0 %v319
          %v321 = vpop.xlane.xlu0 %320
          %v322 = vrcp.pop 32.0
          %v323 = vmul.f32 %v321, %v322
          %v324 = vsub.f32 %v315, %v323
          %v325 = vmul.f32 %v324, %v324
          %v326 = vsel %vm318, %v325, 0.0
          %327 = vadd.xlane.f32.xlu0 %v326
          %v328 = vpop.xlane.xlu0 %327
          %v329 = vmul.f32 %v328, %v322
          %v330 = vadd.f32 %v329, 1e-05
          %v331 = vrsqrt.pop %v330
          %v332 = vmul.f32 %v324, %v331
          %v334 = vlaneseq
          %v335 = vshrl.u32 %v334, 7
          %v336 = vsub.s32 0, %v335
          %v337 = vrot.slane %v316, %v336
          %v339 = vmul.f32 %v332, %v337
          %v341 = vlaneseq
          %v342 = vshrl.u32 %v341, 7
          %v343 = vsub.s32 0, %v342
          %v344 = vrot.slane %v317, %v343
          %v346 = vadd.f32 %v339, %v344
          %347 = vst.msk [vmem:[#allocation2] sm:$0xff] %vm318, %v346
          $region61: #{tpu_custom_call.1} parent=59
            #allocation11 [shape = 'u8[16384]{0}', space=vmem, size = 0x4000, scoped, tag = 'scoped memory for tpu_custom_call.1']
            $region62: #{tpu_custom_call.1} parent=61
              #allocation12 [shape = 's32[1]{0}', space=sflag, size = 0x4, scoped, tag = 'scoped memory for tpu_custom_call.1']
              // Predicated region
              $region63: #{tpu_custom_call.1} parent=62 // pred_check
                _
              $region64: #{tpu_custom_call.1} parent=62 // pred_check_branch
                %349 = sbr.rel target = $region66
              $region65: #{tpu_custom_call.1} parent=62 // pred_region
                %350 = sst [smem:[#allocation15]] [#allocation14]
                %351 = sst [smem:[#allocation16]] [#allocation13]
              $region66: #{tpu_custom_call.1} parent=62 // pred_fallthru
                _
              %353 = shalt.err (0)
              %s355 = sshll.u32 [#allocation11], 4
              %s356 = int_to_ptr.vmem [resolvable:$true] %s355
              %358 = dma.hbm_to_vmem [thread:$0]  %s4, 512, %s356, [#allocation12]
              %s359 = smul.u32 32, 1
              %s360 = sshll.u32 %s359, 4
              %361 = dma.done [#allocation12], %s360
            %v362 = vld [vmem:[#allocation11] sm:$0xff]
            %v363 = vld [vmem:[#allocation11 + $0x8] sm:$0xff]
            %v364 = vld [vmem:[#allocation11 + $0x10] sm:$0xff]
            %v365 = vld [vmem:[#allocation11 + $0x18] sm:$0xff]
            %v367 = vsel %vm318, %v346, 0
            %369 = vmatprep.subr.mxu0 0.0
            %370 = vmatpush1.msra.mxu0 %v362
            %371 = vmatprep.subr.mxu0 0.0
            %372 = vmatpush1.msra.mxu0 %v363
            %373 = vmatprep.subr.mxu0 0.0
            %374 = vmatpush1.msra.mxu0 %v364
            %375 = vmatprep.subr.mxu0 0.0
            %376 = vmatpush1.msra.mxu0 %v365
            %377 = vmatprep.subr.mxu0 0.0
            %378 = vmatpush1.msra.mxu0 0.0
            %379 = vmatprep.subr.mxu0 0.0
            %380 = vmatpush1.msra.mxu0 0.0
            %381 = vmatprep.subr.mxu0 0.0
            %382 = vmatpush1.msra.mxu0 0.0
            %383 = vmatprep.subr.mxu0 0.0
            %384 = vmatpush1.msra.mxu0 0.0
            %385 = vmatprep.subr.mxu0 0.0
            %386 = vmatpush1.msra.mxu0 0.0
            %387 = vmatprep.subr.mxu0 0.0
            %388 = vmatpush1.msra.mxu0 0.0
            %389 = vmatprep.subr.mxu0 0.0
            %390 = vmatpush1.msra.mxu0 0.0
            %391 = vmatprep.subr.mxu0 0.0
            %392 = vmatpush1.msra.mxu0 0.0
            %393 = vmatprep.subr.mxu0 0.0
            %394 = vmatpush1.msra.mxu0 0.0
            %395 = vmatprep.subr.mxu0 0.0
            %396 = vmatpush1.msra.mxu0 0.0
            %397 = vmatprep.subr.mxu0 0.0
            %398 = vmatpush1.msra.mxu0 0.0
            %399 = vmatprep.subr.mxu0 0.0
            %400 = vmatpush1.msra.mxu0 0.0
            %401 = vmatprep.subr.mxu0 0.0
            %402 = vmatpush1.msra.mxu0 0.0
            %403 = vmatprep.subr.mxu0 0.0
            %404 = vmatpush1.msra.mxu0 0.0
            %405 = vmatprep.subr.mxu0 0.0
            %406 = vmatpush1.msra.mxu0 0.0
            %407 = vmatprep.subr.mxu0 0.0
            %408 = vmatpush1.msra.mxu0 0.0
            %409 = vmatprep.subr.mxu0 0.0
            %410 = vmatpush1.msra.mxu0 0.0
            %411 = vmatprep.subr.mxu0 0.0
            %412 = vmatpush1.msra.mxu0 0.0
            %413 = vmatprep.subr.mxu0 0.0
            %414 = vmatpush1.msra.mxu0 0.0
            %415 = vmatprep.subr.mxu0 0.0
            %416 = vmatpush1.msra.mxu0 0.0
            %417 = vmatprep.subr.mxu0 0.0
            %418 = vmatpush1.msra.mxu0 0.0
            %419 = vmatprep.subr.mxu0 0.0
            %420 = vmatpush1.msra.mxu0 0.0
            %421 = vmatprep.subr.mxu0 0.0
            %422 = vmatpush1.msra.mxu0 0.0
            %423 = vmatprep.subr.mxu0 0.0
            %424 = vmatpush1.msra.mxu0 0.0
            %425 = vmatprep.subr.mxu0 0.0
            %426 = vmatpush1.msra.mxu0 0.0
            %427 = vmatprep.subr.mxu0 0.0
            %428 = vmatpush1.msra.mxu0 0.0
            %429 = vmatprep.subr.mxu0 0.0
            %430 = vmatpush1.msra.mxu0 0.0
            %431 = vmatprep.subr.mxu0 0.0
            %432 = vmatpush1.msra.mxu0 0.0
            %433 = vmatprep.mubr.f32.mxu0 0.0
            %434 = vmatmul.mubr.f32.gmra.mrb[0].mxu0 %v367
            %v435 = vpop.f32.mrb[0].mxu0
            %v436 = vadd.f32 0.0, %v435
            %v437 = vpop.f32.mrb[0].mxu0
            %438 = vdwg.mxu0
            %vm439 = vcmask 523264
            %440 = vst.msk [vmem:[#allocation3] sm:$0xff] %vm439, %v436
        $region60: #{tpu_custom_call.1} parent=43 // pred_fallthru
          _
        %s441 = smul.u32 %s30, 8
        %s442 = scalar_lea.vmem [#allocation2], %s441
        %v443 = vld [vmem:[%s442] sm:$0xff]
        %v444 = vld [vmem:[#allocation7] sm:$0xff]
        %v445 = vld [vmem:[#allocation7 + $0x8] sm:$0xff]
        %v446 = vld [vmem:[#allocation7 + $0x10] sm:$0xff]
        %v447 = vld [vmem:[#allocation7 + $0x18] sm:$0xff]
        %vm448 = vcmask 261120
        %v450 = vsel %vm448, %v443, 0
        %452 = vmatprep.subr.mxu0 0.0
        %453 = vmatpush1.msra.mxu0 %v444
        %454 = vmatprep.subr.mxu0 0.0
        %455 = vmatpush1.msra.mxu0 %v445
        %456 = vmatprep.subr.mxu0 0.0
        %457 = vmatpush1.msra.mxu0 %v446
        %458 = vmatprep.subr.mxu0 0.0
        %459 = vmatpush1.msra.mxu0 %v447
        %460 = vmatprep.subr.mxu0 0.0
        %461 = vmatpush1.msra.mxu0 0.0
        %462 = vmatprep.subr.mxu0 0.0
        %463 = vmatpush1.msra.mxu0 0.0
        %464 = vmatprep.subr.mxu0 0.0
        %465 = vmatpush1.msra.mxu0 0.0
        %466 = vmatprep.subr.mxu0 0.0
        %467 = vmatpush1.msra.mxu0 0.0
        %468 = vmatprep.subr.mxu0 0.0
        %469 = vmatpush1.msra.mxu0 0.0
        %470 = vmatprep.subr.mxu0 0.0
        %471 = vmatpush1.msra.mxu0 0.0
        %472 = vmatprep.subr.mxu0 0.0
        %473 = vmatpush1.msra.mxu0 0.0
        %474 = vmatprep.subr.mxu0 0.0
        %475 = vmatpush1.msra.mxu0 0.0
        %476 = vmatprep.subr.mxu0 0.0
        %477 = vmatpush1.msra.mxu0 0.0
        %478 = vmatprep.subr.mxu0 0.0
        %479 = vmatpush1.msra.mxu0 0.0
        %480 = vmatprep.subr.mxu0 0.0
        %481 = vmatpush1.msra.mxu0 0.0
        %482 = vmatprep.subr.mxu0 0.0
        %483 = vmatpush1.msra.mxu0 0.0
        %484 = vmatprep.subr.mxu0 0.0
        %485 = vmatpush1.msra.mxu0 0.0
        %486 = vmatprep.subr.mxu0 0.0
        %487 = vmatpush1.msra.mxu0 0.0
        %488 = vmatprep.subr.mxu0 0.0
        %489 = vmatpush1.msra.mxu0 0.0
        %490 = vmatprep.subr.mxu0 0.0
        %491 = vmatpush1.msra.mxu0 0.0
        %492 = vmatprep.subr.mxu0 0.0
        %493 = vmatpush1.msra.mxu0 0.0
        %494 = vmatprep.subr.mxu0 0.0
        %495 = vmatpush1.msra.mxu0 0.0
        %496 = vmatprep.subr.mxu0 0.0
        %497 = vmatpush1.msra.mxu0 0.0
        %498 = vmatprep.subr.mxu0 0.0
        %499 = vmatpush1.msra.mxu0 0.0
        %500 = vmatprep.subr.mxu0 0.0
        %501 = vmatpush1.msra.mxu0 0.0
        %502 = vmatprep.subr.mxu0 0.0
        %503 = vmatpush1.msra.mxu0 0.0
        %504 = vmatprep.subr.mxu0 0.0
        %505 = vmatpush1.msra.mxu0 0.0
        %506 = vmatprep.subr.mxu0 0.0
        %507 = vmatpush1.msra.mxu0 0.0
        %508 = vmatprep.subr.mxu0 0.0
        %509 = vmatpush1.msra.mxu0 0.0
        %510 = vmatprep.subr.mxu0 0.0
        %511 = vmatpush1.msra.mxu0 0.0
        %512 = vmatprep.subr.mxu0 0.0
        %513 = vmatpush1.msra.mxu0 0.0
        %514 = vmatprep.subr.mxu0 0.0
        %515 = vmatpush1.msra.mxu0 0.0
        %516 = vmatprep.mubr.f32.mxu0 0.0
        %517 = vmatmul.mubr.f32.gmra.mrb[0].mxu0 %v450
        %v518 = vpop.f32.mrb[0].mxu0
        %v519 = vadd.f32 0.0, %v518
        %v520 = vpop.f32.mrb[0].mxu0
        %521 = vdwg.mxu0
        %v522 = vld [vmem:[%s6] sm:$0x1]
        %v524 = vlaneseq
        %v525 = vshrl.u32 %v524, 7
        %v526 = vsub.s32 0, %v525
        %v527 = vrot.slane %v522, %v526
        %v529 = vadd.f32 %v527, 0.0
        %531 = vrot.lane.b32.xlu0 %v519, 120
        %v532 = vpop.permute.xlu0 %531
        %533 = vrot.lane.b32.xlu0 %v519, 112
        %v534 = vpop.permute.xlu0 %533
        %535 = vrot.lane.b32.xlu0 %v519, 104
        %v536 = vpop.permute.xlu0 %535
        %v537 = vld [vmem:[#allocation3] sm:$0xff]
        %539 = vrot.lane.b32.xlu0 %v537, 120
        %v540 = vpop.permute.xlu0 %539
        %542 = vrot.lane.b32.xlu0 %v537, 112
        %v543 = vpop.permute.xlu0 %542
        %545 = vrot.lane.b32.xlu0 %v537, 104
        %v546 = vpop.permute.xlu0 %545
        %548 = vxpose.xlu0.b32.start [1/16] %v537, 128
        %549 = vxpose.xlu0.b32.cont [2/16] 0.0, 128
        %550 = vxpose.xlu0.b32.cont [3/16] 0.0, 128
        %551 = vxpose.xlu0.b32.cont [4/16] 0.0, 128
        %552 = vxpose.xlu0.b32.cont [5/16] 0.0, 128
        %553 = vxpose.xlu0.b32.cont [6/16] 0.0, 128
        %554 = vxpose.xlu0.b32.cont [7/16] 0.0, 128
        %555 = vxpose.xlu0.b32.cont [8/16] 0.0, 128
        %556 = vxpose.xlu0.b32.cont [9/16] 0.0, 128
        %557 = vxpose.xlu0.b32.cont [10/16] 0.0, 128
        %558 = vxpose.xlu0.b32.cont [11/16] 0.0, 128
        %559 = vxpose.xlu0.b32.cont [12/16] 0.0, 128
        %560 = vxpose.xlu0.b32.cont [13/16] 0.0, 128
        %561 = vxpose.xlu0.b32.cont [14/16] 0.0, 128
        %562 = vxpose.xlu0.b32.cont [15/16] 0.0, 128
        %563 = vxpose.xlu0.b32.end [16/16] 0.0, 128
        %v564 = vpop.trf.xlu0
        %v565 = vpop.trf.xlu0
        %v566 = vpop.trf.xlu0
        %v567 = vpop.trf.xlu0
        %v568 = vpop.trf.xlu0
        %v569 = vpop.trf.xlu0
        %v570 = vpop.trf.xlu0
        %v571 = vpop.trf.xlu0
        %v572 = vpop.trf.xlu0
        %v573 = vpop.trf.xlu0
        %v574 = vpop.trf.xlu0
        %v575 = vpop.trf.xlu0
        %v576 = vpop.trf.xlu0
        %v577 = vpop.trf.xlu0
        %v578 = vpop.trf.xlu0
        %v579 = vpop.trf.xlu0
        %580 = vxpose.xlu0.b32.start [1/16] %v540, 128
        %581 = vxpose.xlu0.b32.cont [2/16] 0.0, 128
        %582 = vxpose.xlu0.b32.cont [3/16] 0.0, 128
        %583 = vxpose.xlu0.b32.cont [4/16] 0.0, 128
        %584 = vxpose.xlu0.b32.cont [5/16] 0.0, 128
        %585 = vxpose.xlu0.b32.cont [6/16] 0.0, 128
        %586 = vxpose.xlu0.b32.cont [7/16] 0.0, 128
        %587 = vxpose.xlu0.b32.cont [8/16] 0.0, 128
        %588 = vxpose.xlu0.b32.cont [9/16] 0.0, 128
        %589 = vxpose.xlu0.b32.cont [10/16] 0.0, 128
        %590 = vxpose.xlu0.b32.cont [11/16] 0.0, 128
        %591 = vxpose.xlu0.b32.cont [12/16] 0.0, 128
        %592 = vxpose.xlu0.b32.cont [13/16] 0.0, 128
        %593 = vxpose.xlu0.b32.cont [14/16] 0.0, 128
        %594 = vxpose.xlu0.b32.cont [15/16] 0.0, 128
        %595 = vxpose.xlu0.b32.end [16/16] 0.0, 128
        %v596 = vpop.trf.xlu0
        %v597 = vpop.trf.xlu0
        %v598 = vpop.trf.xlu0
        %v599 = vpop.trf.xlu0
        %v600 = vpop.trf.xlu0
        %v601 = vpop.trf.xlu0
        %v602 = vpop.trf.xlu0
        %v603 = vpop.trf.xlu0
        %v604 = vpop.trf.xlu0
        %v605 = vpop.trf.xlu0
        %v606 = vpop.trf.xlu0
        %v607 = vpop.trf.xlu0
        %v608 = vpop.trf.xlu0
        %v609 = vpop.trf.xlu0
        %v610 = vpop.trf.xlu0
        %v611 = vpop.trf.xlu0
        %612 = vxpose.xlu0.b32.start [1/16] %v543, 128
        %613 = vxpose.xlu0.b32.cont [2/16] 0.0, 128
        %614 = vxpose.xlu0.b32.cont [3/16] 0.0, 128
        %615 = vxpose.xlu0.b32.cont [4/16] 0.0, 128
        %616 = vxpose.xlu0.b32.cont [5/16] 0.0, 128
        %617 = vxpose.xlu0.b32.cont [6/16] 0.0, 128
        %618 = vxpose.xlu0.b32.cont [7/16] 0.0, 128
        %619 = vxpose.xlu0.b32.cont [8/16] 0.0, 128
        %620 = vxpose.xlu0.b32.cont [9/16] 0.0, 128
        %621 = vxpose.xlu0.b32.cont [10/16] 0.0, 128
        %622 = vxpose.xlu0.b32.cont [11/16] 0.0, 128
        %623 = vxpose.xlu0.b32.cont [12/16] 0.0, 128
        %624 = vxpose.xlu0.b32.cont [13/16] 0.0, 128
        %625 = vxpose.xlu0.b32.cont [14/16] 0.0, 128
        %626 = vxpose.xlu0.b32.cont [15/16] 0.0, 128
        %627 = vxpose.xlu0.b32.end [16/16] 0.0, 128
        %v628 = vpop.trf.xlu0
        %v629 = vpop.trf.xlu0
        %v630 = vpop.trf.xlu0
        %v631 = vpop.trf.xlu0
        %v632 = vpop.trf.xlu0
        %v633 = vpop.trf.xlu0
        %v634 = vpop.trf.xlu0
        %v635 = vpop.trf.xlu0
        %v636 = vpop.trf.xlu0
        %v637 = vpop.trf.xlu0
        %v638 = vpop.trf.xlu0
        %v639 = vpop.trf.xlu0
        %v640 = vpop.trf.xlu0
        %v641 = vpop.trf.xlu0
        %v642 = vpop.trf.xlu0
        %v643 = vpop.trf.xlu0
        %644 = vxpose.xlu0.b32.start [1/16] %v546, 128
        %645 = vxpose.xlu0.b32.cont [2/16] 0.0, 128
        %646 = vxpose.xlu0.b32.cont [3/16] 0.0, 128
        %647 = vxpose.xlu0.b32.cont [4/16] 0.0, 128
        %648 = vxpose.xlu0.b32.cont [5/16] 0.0, 128
        %649 = vxpose.xlu0.b32.cont [6/16] 0.0, 128
        %650 = vxpose.xlu0.b32.cont [7/16] 0.0, 128
        %651 = vxpose.xlu0.b32.cont [8/16] 0.0, 128
        %652 = vxpose.xlu0.b32.cont [9/16] 0.0, 128
        %653 = vxpose.xlu0.b32.cont [10/16] 0.0, 128
        %654 = vxpose.xlu0.b32.cont [11/16] 0.0, 128
        %655 = vxpose.xlu0.b32.cont [12/16] 0.0, 128
        %656 = vxpose.xlu0.b32.cont [13/16] 0.0, 128
        %657 = vxpose.xlu0.b32.cont [14/16] 0.0, 128
        %658 = vxpose.xlu0.b32.cont [15/16] 0.0, 128
        %659 = vxpose.xlu0.b32.end [16/16] 0.0, 128
        %v660 = vpop.trf.xlu0
        %v661 = vpop.trf.xlu0
        %v662 = vpop.trf.xlu0
        %v663 = vpop.trf.xlu0
        %v664 = vpop.trf.xlu0
        %v665 = vpop.trf.xlu0
        %v666 = vpop.trf.xlu0
        %v667 = vpop.trf.xlu0
        %v668 = vpop.trf.xlu0
        %v669 = vpop.trf.xlu0
        %v670 = vpop.trf.xlu0
        %v671 = vpop.trf.xlu0
        %v672 = vpop.trf.xlu0
        %v673 = vpop.trf.xlu0
        %v674 = vpop.trf.xlu0
        %v675 = vpop.trf.xlu0
        %vm676 = vcmask 64512
        %v677 = vsel %vm676, %v519, 0
        %679 = vmatprep.subr.mxu0 0.0
        %680 = vmatpush1.msra.mxu0 %v564
        %681 = vmatprep.subr.mxu0 0.0
        %682 = vmatpush1.msra.mxu0 0.0
        %683 = vmatprep.subr.mxu0 0.0
        %684 = vmatpush1.msra.mxu0 0.0
        %685 = vmatprep.subr.mxu0 0.0
        %686 = vmatpush1.msra.mxu0 0.0
        %687 = vmatprep.subr.mxu0 0.0
        %688 = vmatpush1.msra.mxu0 0.0
        %689 = vmatprep.subr.mxu0 0.0
        %690 = vmatpush1.msra.mxu0 0.0
        %691 = vmatprep.subr.mxu0 0.0
        %692 = vmatpush1.msra.mxu0 0.0
        %693 = vmatprep.subr.mxu0 0.0
        %694 = vmatpush1.msra.mxu0 0.0
        %695 = vmatprep.subr.mxu0 0.0
        %696 = vmatpush1.msra.mxu0 0.0
        %697 = vmatprep.subr.mxu0 0.0
        %698 = vmatpush1.msra.mxu0 0.0
        %699 = vmatprep.subr.mxu0 0.0
        %700 = vmatpush1.msra.mxu0 0.0
        %701 = vmatprep.subr.mxu0 0.0
        %702 = vmatpush1.msra.mxu0 0.0
        %703 = vmatprep.subr.mxu0 0.0
        %704 = vmatpush1.msra.mxu0 0.0
        %705 = vmatprep.subr.mxu0 0.0
        %706 = vmatpush1.msra.mxu0 0.0
        %707 = vmatprep.subr.mxu0 0.0
        %708 = vmatpush1.msra.mxu0 0.0
        %709 = vmatprep.subr.mxu0 0.0
        %710 = vmatpush1.msra.mxu0 0.0
        %711 = vmatprep.subr.mxu0 0.0
        %712 = vmatpush1.msra.mxu0 0.0
        %713 = vmatprep.subr.mxu0 0.0
        %714 = vmatpush1.msra.mxu0 0.0
        %715 = vmatprep.subr.mxu0 0.0
        %716 = vmatpush1.msra.mxu0 0.0
        %717 = vmatprep.subr.mxu0 0.0
        %718 = vmatpush1.msra.mxu0 0.0
        %719 = vmatprep.subr.mxu0 0.0
        %720 = vmatpush1.msra.mxu0 0.0
        %721 = vmatprep.subr.mxu0 0.0
        %722 = vmatpush1.msra.mxu0 0.0
        %723 = vmatprep.subr.mxu0 0.0
        %724 = vmatpush1.msra.mxu0 0.0
        %725 = vmatprep.subr.mxu0 0.0
        %726 = vmatpush1.msra.mxu0 0.0
        %727 = vmatprep.subr.mxu0 0.0
        %728 = vmatpush1.msra.mxu0 0.0
        %729 = vmatprep.subr.mxu0 0.0
        %730 = vmatpush1.msra.mxu0 0.0
        %731 = vmatprep.subr.mxu0 0.0
        %732 = vmatpush1.msra.mxu0 0.0
        %733 = vmatprep.subr.mxu0 0.0
        %734 = vmatpush1.msra.mxu0 0.0
        %735 = vmatprep.subr.mxu0 0.0
        %736 = vmatpush1.msra.mxu0 0.0
        %737 = vmatprep.subr.mxu0 0.0
        %738 = vmatpush1.msra.mxu0 0.0
        %739 = vmatprep.subr.mxu0 0.0
        %740 = vmatpush1.msra.mxu0 0.0
        %741 = vmatprep.subr.mxu0 0.0
        %742 = vmatpush1.msra.mxu0 0.0
        %743 = vmatprep.mubr.f32.mxu0 0.0
        %744 = vmatmul.mubr.f32.gmra.mrb[0].mxu0 %v677
        %v745 = vpop.f32.mrb[0].mxu0
        %v746 = vadd.f32 0.0, %v745
        %v747 = vpop.f32.mrb[0].mxu0
        %748 = vdwg.mxu0
        %v749 = vsel %vm676, %v532, 0
        %751 = vmatprep.subr.mxu0 0.0
        %752 = vmatpush1.msra.mxu0 %v596
        %753 = vmatprep.subr.mxu0 0.0
        %754 = vmatpush1.msra.mxu0 0.0
        %755 = vmatprep.subr.mxu0 0.0
        %756 = vmatpush1.msra.mxu0 0.0
        %757 = vmatprep.subr.mxu0 0.0
        %758 = vmatpush1.msra.mxu0 0.0
        %759 = vmatprep.subr.mxu0 0.0
        %760 = vmatpush1.msra.mxu0 0.0
        %761 = vmatprep.subr.mxu0 0.0
        %762 = vmatpush1.msra.mxu0 0.0
        %763 = vmatprep.subr.mxu0 0.0
        %764 = vmatpush1.msra.mxu0 0.0
        %765 = vmatprep.subr.mxu0 0.0
        %766 = vmatpush1.msra.mxu0 0.0
        %767 = vmatprep.subr.mxu0 0.0
        %768 = vmatpush1.msra.mxu0 0.0
        %769 = vmatprep.subr.mxu0 0.0
        %770 = vmatpush1.msra.mxu0 0.0
        %771 = vmatprep.subr.mxu0 0.0
        %772 = vmatpush1.msra.mxu0 0.0
        %773 = vmatprep.subr.mxu0 0.0
        %774 = vmatpush1.msra.mxu0 0.0
        %775 = vmatprep.subr.mxu0 0.0
        %776 = vmatpush1.msra.mxu0 0.0
        %777 = vmatprep.subr.mxu0 0.0
        %778 = vmatpush1.msra.mxu0 0.0
        %779 = vmatprep.subr.mxu0 0.0
        %780 = vmatpush1.msra.mxu0 0.0
        %781 = vmatprep.subr.mxu0 0.0
        %782 = vmatpush1.msra.mxu0 0.0
        %783 = vmatprep.subr.mxu0 0.0
        %784 = vmatpush1.msra.mxu0 0.0
        %785 = vmatprep.subr.mxu0 0.0
        %786 = vmatpush1.msra.mxu0 0.0
        %787 = vmatprep.subr.mxu0 0.0
        %788 = vmatpush1.msra.mxu0 0.0
        %789 = vmatprep.subr.mxu0 0.0
        %790 = vmatpush1.msra.mxu0 0.0
        %791 = vmatprep.subr.mxu0 0.0
        %792 = vmatpush1.msra.mxu0 0.0
        %793 = vmatprep.subr.mxu0 0.0
        %794 = vmatpush1.msra.mxu0 0.0
        %795 = vmatprep.subr.mxu0 0.0
        %796 = vmatpush1.msra.mxu0 0.0
        %797 = vmatprep.subr.mxu0 0.0
        %798 = vmatpush1.msra.mxu0 0.0
        %799 = vmatprep.subr.mxu0 0.0
        %800 = vmatpush1.msra.mxu0 0.0
        %801 = vmatprep.subr.mxu0 0.0
        %802 = vmatpush1.msra.mxu0 0.0
        %803 = vmatprep.subr.mxu0 0.0
        %804 = vmatpush1.msra.mxu0 0.0
        %805 = vmatprep.subr.mxu0 0.0
        %806 = vmatpush1.msra.mxu0 0.0
        %807 = vmatprep.subr.mxu0 0.0
        %808 = vmatpush1.msra.mxu0 0.0
        %809 = vmatprep.subr.mxu0 0.0
        %810 = vmatpush1.msra.mxu0 0.0
        %811 = vmatprep.subr.mxu0 0.0
        %812 = vmatpush1.msra.mxu0 0.0
        %813 = vmatprep.subr.mxu0 0.0
        %814 = vmatpush1.msra.mxu0 0.0
        %815 = vmatprep.mubr.f32.mxu0 0.0
        %816 = vmatmul.mubr.f32.gmra.mrb[0].mxu0 %v749
        %v817 = vpop.f32.mrb[0].mxu0
        %v818 = vadd.f32 0.0, %v817
        %v819 = vpop.f32.mrb[0].mxu0
        %820 = vdwg.mxu0
        %v821 = vsel %vm676, %v534, 0
        %823 = vmatprep.subr.mxu0 0.0
        %824 = vmatpush1.msra.mxu0 %v628
        %825 = vmatprep.subr.mxu0 0.0
        %826 = vmatpush1.msra.mxu0 0.0
        %827 = vmatprep.subr.mxu0 0.0
        %828 = vmatpush1.msra.mxu0 0.0
        %829 = vmatprep.subr.mxu0 0.0
        %830 = vmatpush1.msra.mxu0 0.0
        %831 = vmatprep.subr.mxu0 0.0
        %832 = vmatpush1.msra.mxu0 0.0
        %833 = vmatprep.subr.mxu0 0.0
        %834 = vmatpush1.msra.mxu0 0.0
        %835 = vmatprep.subr.mxu0 0.0
        %836 = vmatpush1.msra.mxu0 0.0
        %837 = vmatprep.subr.mxu0 0.0
        %838 = vmatpush1.msra.mxu0 0.0
        %839 = vmatprep.subr.mxu0 0.0
        %840 = vmatpush1.msra.mxu0 0.0
        %841 = vmatprep.subr.mxu0 0.0
        %842 = vmatpush1.msra.mxu0 0.0
        %843 = vmatprep.subr.mxu0 0.0
        %844 = vmatpush1.msra.mxu0 0.0
        %845 = vmatprep.subr.mxu0 0.0
        %846 = vmatpush1.msra.mxu0 0.0
        %847 = vmatprep.subr.mxu0 0.0
        %848 = vmatpush1.msra.mxu0 0.0
        %849 = vmatprep.subr.mxu0 0.0
        %850 = vmatpush1.msra.mxu0 0.0
        %851 = vmatprep.subr.mxu0 0.0
        %852 = vmatpush1.msra.mxu0 0.0
        %853 = vmatprep.subr.mxu0 0.0
        %854 = vmatpush1.msra.mxu0 0.0
        %855 = vmatprep.subr.mxu0 0.0
        %856 = vmatpush1.msra.mxu0 0.0
        %857 = vmatprep.subr.mxu0 0.0
        %858 = vmatpush1.msra.mxu0 0.0
        %859 = vmatprep.subr.mxu0 0.0
        %860 = vmatpush1.msra.mxu0 0.0
        %861 = vmatprep.subr.mxu0 0.0
        %862 = vmatpush1.msra.mxu0 0.0
        %863 = vmatprep.subr.mxu0 0.0
        %864 = vmatpush1.msra.mxu0 0.0
        %865 = vmatprep.subr.mxu0 0.0
        %866 = vmatpush1.msra.mxu0 0.0
        %867 = vmatprep.subr.mxu0 0.0
        %868 = vmatpush1.msra.mxu0 0.0
        %869 = vmatprep.subr.mxu0 0.0
        %870 = vmatpush1.msra.mxu0 0.0
        %871 = vmatprep.subr.mxu0 0.0
        %872 = vmatpush1.msra.mxu0 0.0
        %873 = vmatprep.subr.mxu0 0.0
        %874 = vmatpush1.msra.mxu0 0.0
        %875 = vmatprep.subr.mxu0 0.0
        %876 = vmatpush1.msra.mxu0 0.0
        %877 = vmatprep.subr.mxu0 0.0
        %878 = vmatpush1.msra.mxu0 0.0
        %879 = vmatprep.subr.mxu0 0.0
        %880 = vmatpush1.msra.mxu0 0.0
        %881 = vmatprep.subr.mxu0 0.0
        %882 = vmatpush1.msra.mxu0 0.0
        %883 = vmatprep.subr.mxu0 0.0
        %884 = vmatpush1.msra.mxu0 0.0
        %885 = vmatprep.subr.mxu0 0.0
        %886 = vmatpush1.msra.mxu0 0.0
        %887 = vmatprep.mubr.f32.mxu0 0.0
        %888 = vmatmul.mubr.f32.gmra.mrb[0].mxu0 %v821
        %v889 = vpop.f32.mrb[0].mxu0
        %v890 = vadd.f32 0.0, %v889
        %v891 = vpop.f32.mrb[0].mxu0
        %892 = vdwg.mxu0
        %v893 = vsel %vm676, %v536, 0
        %895 = vmatprep.subr.mxu0 0.0
        %896 = vmatpush1.msra.mxu0 %v660
        %897 = vmatprep.subr.mxu0 0.0
        %898 = vmatpush1.msra.mxu0 0.0
        %899 = vmatprep.subr.mxu0 0.0
        %900 = vmatpush1.msra.mxu0 0.0
        %901 = vmatprep.subr.mxu0 0.0
        %902 = vmatpush1.msra.mxu0 0.0
        %903 = vmatprep.subr.mxu0 0.0
        %904 = vmatpush1.msra.mxu0 0.0
        %905 = vmatprep.subr.mxu0 0.0
        %906 = vmatpush1.msra.mxu0 0.0
        %907 = vmatprep.subr.mxu0 0.0
        %908 = vmatpush1.msra.mxu0 0.0
        %909 = vmatprep.subr.mxu0 0.0
        %910 = vmatpush1.msra.mxu0 0.0
        %911 = vmatprep.subr.mxu0 0.0
        %912 = vmatpush1.msra.mxu0 0.0
        %913 = vmatprep.subr.mxu0 0.0
        %914 = vmatpush1.msra.mxu0 0.0
        %915 = vmatprep.subr.mxu0 0.0
        %916 = vmatpush1.msra.mxu0 0.0
        %917 = vmatprep.subr.mxu0 0.0
        %918 = vmatpush1.msra.mxu0 0.0
        %919 = vmatprep.subr.mxu0 0.0
        %920 = vmatpush1.msra.mxu0 0.0
        %921 = vmatprep.subr.mxu0 0.0
        %922 = vmatpush1.msra.mxu0 0.0
        %923 = vmatprep.subr.mxu0 0.0
        %924 = vmatpush1.msra.mxu0 0.0
        %925 = vmatprep.subr.mxu0 0.0
        %926 = vmatpush1.msra.mxu0 0.0
        %927 = vmatprep.subr.mxu0 0.0
        %928 = vmatpush1.msra.mxu0 0.0
        %929 = vmatprep.subr.mxu0 0.0
        %930 = vmatpush1.msra.mxu0 0.0
        %931 = vmatprep.subr.mxu0 0.0
        %932 = vmatpush1.msra.mxu0 0.0
        %933 = vmatprep.subr.mxu0 0.0
        %934 = vmatpush1.msra.mxu0 0.0
        %935 = vmatprep.subr.mxu0 0.0
        %936 = vmatpush1.msra.mxu0 0.0
        %937 = vmatprep.subr.mxu0 0.0
        %938 = vmatpush1.msra.mxu0 0.0
        %939 = vmatprep.subr.mxu0 0.0
        %940 = vmatpush1.msra.mxu0 0.0
        %941 = vmatprep.subr.mxu0 0.0
        %942 = vmatpush1.msra.mxu0 0.0
        %943 = vmatprep.subr.mxu0 0.0
        %944 = vmatpush1.msra.mxu0 0.0
        %945 = vmatprep.subr.mxu0 0.0
        %946 = vmatpush1.msra.mxu0 0.0
        %947 = vmatprep.subr.mxu0 0.0
        %948 = vmatpush1.msra.mxu0 0.0
        %949 = vmatprep.subr.mxu0 0.0
        %950 = vmatpush1.msra.mxu0 0.0
        %951 = vmatprep.subr.mxu0 0.0
        %952 = vmatpush1.msra.mxu0 0.0
        %953 = vmatprep.subr.mxu0 0.0
        %954 = vmatpush1.msra.mxu0 0.0
        %955 = vmatprep.subr.mxu0 0.0
        %956 = vmatpush1.msra.mxu0 0.0
        %957 = vmatprep.subr.mxu0 0.0
        %958 = vmatpush1.msra.mxu0 0.0
        %959 = vmatprep.mubr.f32.mxu0 0.0
        %960 = vmatmul.mubr.f32.gmra.mrb[0].mxu0 %v893
        %v961 = vpop.f32.mrb[0].mxu0
        %v962 = vadd.f32 0.0, %v961
        %v963 = vpop.f32.mrb[0].mxu0
        %964 = vdwg.mxu0
        %v965 = vsel %vm676, %v746, -inf
        %966 = vmax.xlane.f32.xlu0 %v965
        %v967 = vpop.xlane.xlu0 %966
        %v968 = vsel %vm676, %v818, -inf
        %969 = vmax.xlane.f32.xlu0 %v968
        %v970 = vpop.xlane.xlu0 %969
        %v971 = vsel %vm676, %v890, -inf
        %972 = vmax.xlane.f32.xlu0 %v971
        %v973 = vpop.xlane.xlu0 %972
        %v974 = vsel %vm676, %v962, -inf
        %975 = vmax.xlane.f32.xlu0 %v974
        %v976 = vpop.xlane.xlu0 %975
        %v977 = vsub.f32 %v746, %v967
        %v978 = vsub.f32 %v818, %v970
        %v979 = vsub.f32 %v890, %v973
        %v980 = vsub.f32 %v962, %v976
        %v981 = vmul.f32 %v977, 1.442695
        %v982 = vpow.pop %v981
        %v983 = vmul.f32 %v978, 1.442695
        %v984 = vpow.pop %v983
        %v985 = vmul.f32 %v979, 1.442695
        %v986 = vpow.pop %v985
        %v987 = vmul.f32 %v980, 1.442695
        %v988 = vpow.pop %v987
        %v989 = vsel %vm676, %v982, 0.0
        %990 = vadd.xlane.f32.xlu0 %v989
        %v991 = vpop.xlane.xlu0 %990
        %v992 = vsel %vm676, %v984, 0.0
        %993 = vadd.xlane.f32.xlu0 %v992
        %v994 = vpop.xlane.xlu0 %993
        %v995 = vsel %vm676, %v986, 0.0
        %996 = vadd.xlane.f32.xlu0 %v995
        %v997 = vpop.xlane.xlu0 %996
        %v998 = vsel %vm676, %v988, 0.0
        %999 = vadd.xlane.f32.xlu0 %v998
        %v1000 = vpop.xlane.xlu0 %999
        %v1001 = vrcp.pop %v991
        %v1002 = vrcp.pop %v994
        %v1003 = vrcp.pop %v997
        %v1004 = vrcp.pop %v1000
        %v1005 = vmul.f32 %v982, %v1001
        %v1006 = vmul.f32 %v984, %v1002
        %v1007 = vmul.f32 %v986, %v1003
        %v1008 = vmul.f32 %v988, %v1004
        %1009 = vrot.lane.b32.xlu0 %v537, 96
        %v1010 = vpop.permute.xlu0 %1009
        %1011 = vrot.lane.b32.xlu0 %v540, 96
        %v1012 = vpop.permute.xlu0 %1011
        %1013 = vrot.lane.b32.xlu0 %v543, 96
        %v1014 = vpop.permute.xlu0 %1013
        %1015 = vrot.lane.b32.xlu0 %v546, 96
        %v1016 = vpop.permute.xlu0 %1015
        %1021 = vxpose.xlu0.b32.start [1/16] %v1010, 128
        %1022 = vxpose.xlu0.b32.cont [2/16] 0.0, 128
        %1023 = vxpose.xlu0.b32.cont [3/16] 0.0, 128
        %1024 = vxpose.xlu0.b32.cont [4/16] 0.0, 128
        %1025 = vxpose.xlu0.b32.cont [5/16] 0.0, 128
        %1026 = vxpose.xlu0.b32.cont [6/16] 0.0, 128
        %1027 = vxpose.xlu0.b32.cont [7/16] 0.0, 128
        %1028 = vxpose.xlu0.b32.cont [8/16] 0.0, 128
        %1029 = vxpose.xlu0.b32.cont [9/16] 0.0, 128
        %1030 = vxpose.xlu0.b32.cont [10/16] 0.0, 128
        %1031 = vxpose.xlu0.b32.cont [11/16] 0.0, 128
        %1032 = vxpose.xlu0.b32.cont [12/16] 0.0, 128
        %1033 = vxpose.xlu0.b32.cont [13/16] 0.0, 128
        %1034 = vxpose.xlu0.b32.cont [14/16] 0.0, 128
        %1035 = vxpose.xlu0.b32.cont [15/16] 0.0, 128
        %1036 = vxpose.xlu0.b32.end [16/16] 0.0, 128
        %v1037 = vpop.trf.xlu0
        %v1038 = vpop.trf.xlu0
        %v1039 = vpop.trf.xlu0
        %v1040 = vpop.trf.xlu0
        %v1041 = vpop.trf.xlu0
        %v1042 = vpop.trf.xlu0
        %v1043 = vpop.trf.xlu0
        %v1044 = vpop.trf.xlu0
        %v1045 = vpop.trf.xlu0
        %v1046 = vpop.trf.xlu0
        %v1047 = vpop.trf.xlu0
        %v1048 = vpop.trf.xlu0
        %v1049 = vpop.trf.xlu0
        %v1050 = vpop.trf.xlu0
        %v1051 = vpop.trf.xlu0
        %v1052 = vpop.trf.xlu0
        %1053 = vxpose.xlu0.b32.start [1/16] %v1012, 128
        %1054 = vxpose.xlu0.b32.cont [2/16] 0.0, 128
        %1055 = vxpose.xlu0.b32.cont [3/16] 0.0, 128
        %1056 = vxpose.xlu0.b32.cont [4/16] 0.0, 128
        %1057 = vxpose.xlu0.b32.cont [5/16] 0.0, 128
        %1058 = vxpose.xlu0.b32.cont [6/16] 0.0, 128
        %1059 = vxpose.xlu0.b32.cont [7/16] 0.0, 128
        %1060 = vxpose.xlu0.b32.cont [8/16] 0.0, 128
        %1061 = vxpose.xlu0.b32.cont [9/16] 0.0, 128
        %1062 = vxpose.xlu0.b32.cont [10/16] 0.0, 128
        %1063 = vxpose.xlu0.b32.cont [11/16] 0.0, 128
        %1064 = vxpose.xlu0.b32.cont [12/16] 0.0, 128
        %1065 = vxpose.xlu0.b32.cont [13/16] 0.0, 128
        %1066 = vxpose.xlu0.b32.cont [14/16] 0.0, 128
        %1067 = vxpose.xlu0.b32.cont [15/16] 0.0, 128
        %1068 = vxpose.xlu0.b32.end [16/16] 0.0, 128
        %v1069 = vpop.trf.xlu0
        %v1070 = vpop.trf.xlu0
        %v1071 = vpop.trf.xlu0
        %v1072 = vpop.trf.xlu0
        %v1073 = vpop.trf.xlu0
        %v1074 = vpop.trf.xlu0
        %v1075 = vpop.trf.xlu0
        %v1076 = vpop.trf.xlu0
        %v1077 = vpop.trf.xlu0
        %v1078 = vpop.trf.xlu0
        %v1079 = vpop.trf.xlu0
        %v1080 = vpop.trf.xlu0
        %v1081 = vpop.trf.xlu0
        %v1082 = vpop.trf.xlu0
        %v1083 = vpop.trf.xlu0
        %v1084 = vpop.trf.xlu0
        %1085 = vxpose.xlu0.b32.start [1/16] %v1014, 128
        %1086 = vxpose.xlu0.b32.cont [2/16] 0.0, 128
        %1087 = vxpose.xlu0.b32.cont [3/16] 0.0, 128
        %1088 = vxpose.xlu0.b32.cont [4/16] 0.0, 128
        %1089 = vxpose.xlu0.b32.cont [5/16] 0.0, 128
        %1090 = vxpose.xlu0.b32.cont [6/16] 0.0, 128
        %1091 = vxpose.xlu0.b32.cont [7/16] 0.0, 128
        %1092 = vxpose.xlu0.b32.cont [8/16] 0.0, 128
        %1093 = vxpose.xlu0.b32.cont [9/16] 0.0, 128
        %1094 = vxpose.xlu0.b32.cont [10/16] 0.0, 128
        %1095 = vxpose.xlu0.b32.cont [11/16] 0.0, 128
        %1096 = vxpose.xlu0.b32.cont [12/16] 0.0, 128
        %1097 = vxpose.xlu0.b32.cont [13/16] 0.0, 128
        %1098 = vxpose.xlu0.b32.cont [14/16] 0.0, 128
        %1099 = vxpose.xlu0.b32.cont [15/16] 0.0, 128
        %1100 = vxpose.xlu0.b32.end [16/16] 0.0, 128
        %v1101 = vpop.trf.xlu0
        %v1102 = vpop.trf.xlu0
        %v1103 = vpop.trf.xlu0
        %v1104 = vpop.trf.xlu0
        %v1105 = vpop.trf.xlu0
        %v1106 = vpop.trf.xlu0
        %v1107 = vpop.trf.xlu0
        %v1108 = vpop.trf.xlu0
        %v1109 = vpop.trf.xlu0
        %v1110 = vpop.trf.xlu0
        %v1111 = vpop.trf.xlu0
        %v1112 = vpop.trf.xlu0
        %v1113 = vpop.trf.xlu0
        %v1114 = vpop.trf.xlu0
        %v1115 = vpop.trf.xlu0
        %v1116 = vpop.trf.xlu0
        %1117 = vxpose.xlu0.b32.start [1/16] %v1016, 128
        %1118 = vxpose.xlu0.b32.cont [2/16] 0.0, 128
        %1119 = vxpose.xlu0.b32.cont [3/16] 0.0, 128
        %1120 = vxpose.xlu0.b32.cont [4/16] 0.0, 128
        %1121 = vxpose.xlu0.b32.cont [5/16] 0.0, 128
        %1122 = vxpose.xlu0.b32.cont [6/16] 0.0, 128
        %1123 = vxpose.xlu0.b32.cont [7/16] 0.0, 128
        %1124 = vxpose.xlu0.b32.cont [8/16] 0.0, 128
        %1125 = vxpose.xlu0.b32.cont [9/16] 0.0, 128
        %1126 = vxpose.xlu0.b32.cont [10/16] 0.0, 128
        %1127 = vxpose.xlu0.b32.cont [11/16] 0.0, 128
        %1128 = vxpose.xlu0.b32.cont [12/16] 0.0, 128
        %1129 = vxpose.xlu0.b32.cont [13/16] 0.0, 128
        %1130 = vxpose.xlu0.b32.cont [14/16] 0.0, 128
        %1131 = vxpose.xlu0.b32.cont [15/16] 0.0, 128
        %1132 = vxpose.xlu0.b32.end [16/16] 0.0, 128
        %v1133 = vpop.trf.xlu0
        %v1134 = vpop.trf.xlu0
        %v1135 = vpop.trf.xlu0
        %v1136 = vpop.trf.xlu0
        %v1137 = vpop.trf.xlu0
        %v1138 = vpop.trf.xlu0
        %v1139 = vpop.trf.xlu0
        %v1140 = vpop.trf.xlu0
        %v1141 = vpop.trf.xlu0
        %v1142 = vpop.trf.xlu0
        %v1143 = vpop.trf.xlu0
        %v1144 = vpop.trf.xlu0
        %v1145 = vpop.trf.xlu0
        %v1146 = vpop.trf.xlu0
        %v1147 = vpop.trf.xlu0
        %v1148 = vpop.trf.xlu0
        %v1150 = vsel %vm676, %v1037, 0
        %v1153 = vsel %vm676, %v1005, 0
        %1155 = vmatprep.subr.mxu0 0.0
        %1156 = vmatpush1.xpose.msra.mxu0 %v1153
        %1157 = vmatprep.subr.mxu0 0.0
        %1158 = vmatpush1.xpose.msra.mxu0 0.0
        %1159 = vmatprep.subr.mxu0 0.0
        %1160 = vmatpush1.xpose.msra.mxu0 0.0
        %1161 = vmatprep.subr.mxu0 0.0
        %1162 = vmatpush1.xpose.msra.mxu0 0.0
        %1163 = vmatprep.subr.mxu0 0.0
        %1164 = vmatpush1.xpose.msra.mxu0 0.0
        %1165 = vmatprep.subr.mxu0 0.0
        %1166 = vmatpush1.xpose.msra.mxu0 0.0
        %1167 = vmatprep.subr.mxu0 0.0
        %1168 = vmatpush1.xpose.msra.mxu0 0.0
        %1169 = vmatprep.subr.mxu0 0.0
        %1170 = vmatpush1.xpose.msra.mxu0 0.0
        %1171 = vmatprep.subr.mxu0 0.0
        %1172 = vmatpush1.xpose.msra.mxu0 0.0
        %1173 = vmatprep.subr.mxu0 0.0
        %1174 = vmatpush1.xpose.msra.mxu0 0.0
        %1175 = vmatprep.subr.mxu0 0.0
        %1176 = vmatpush1.xpose.msra.mxu0 0.0
        %1177 = vmatprep.subr.mxu0 0.0
        %1178 = vmatpush1.xpose.msra.mxu0 0.0
        %1179 = vmatprep.subr.mxu0 0.0
        %1180 = vmatpush1.xpose.msra.mxu0 0.0
        %1181 = vmatprep.subr.mxu0 0.0
        %1182 = vmatpush1.xpose.msra.mxu0 0.0
        %1183 = vmatprep.subr.mxu0 0.0
        %1184 = vmatpush1.xpose.msra.mxu0 0.0
        %1185 = vmatprep.subr.mxu0 0.0
        %1186 = vmatpush1.xpose.msra.mxu0 0.0
        %1187 = vmatprep.subr.mxu0 0.0
        %1188 = vmatpush1.xpose.msra.mxu0 0.0
        %1189 = vmatprep.subr.mxu0 0.0
        %1190 = vmatpush1.xpose.msra.mxu0 0.0
        %1191 = vmatprep.subr.mxu0 0.0
        %1192 = vmatpush1.xpose.msra.mxu0 0.0
        %1193 = vmatprep.subr.mxu0 0.0
        %1194 = vmatpush1.xpose.msra.mxu0 0.0
        %1195 = vmatprep.subr.mxu0 0.0
        %1196 = vmatpush1.xpose.msra.mxu0 0.0
        %1197 = vmatprep.subr.mxu0 0.0
        %1198 = vmatpush1.xpose.msra.mxu0 0.0
        %1199 = vmatprep.subr.mxu0 0.0
        %1200 = vmatpush1.xpose.msra.mxu0 0.0
        %1201 = vmatprep.subr.mxu0 0.0
        %1202 = vmatpush1.xpose.msra.mxu0 0.0
        %1203 = vmatprep.subr.mxu0 0.0
        %1204 = vmatpush1.xpose.msra.mxu0 0.0
        %1205 = vmatprep.subr.mxu0 0.0
        %1206 = vmatpush1.xpose.msra.mxu0 0.0
        %1207 = vmatprep.subr.mxu0 0.0
        %1208 = vmatpush1.xpose.msra.mxu0 0.0
        %1209 = vmatprep.subr.mxu0 0.0
        %1210 = vmatpush1.xpose.msra.mxu0 0.0
        %1211 = vmatprep.subr.mxu0 0.0
        %1212 = vmatpush1.xpose.msra.mxu0 0.0
        %1213 = vmatprep.subr.mxu0 0.0
        %1214 = vmatpush1.xpose.msra.mxu0 0.0
        %1215 = vmatprep.subr.mxu0 0.0
        %1216 = vmatpush1.xpose.msra.mxu0 0.0
        %1217 = vmatprep.subr.mxu0 0.0
        %1218 = vmatpush1.xpose.msra.mxu0 0.0
        %1219 = vmatprep.mubr.f32.mxu0 0.0
        %1220 = vmatmul.mubr.f32.gmra.mrb[0].mxu0 %v1150
        %v1221 = vpop.f32.mrb[0].mxu0
        %v1222 = vadd.f32 0.0, %v1221
        %v1223 = vpop.f32.mrb[0].mxu0
        %1224 = vdwg.mxu0
        %v1226 = vsel %vm676, %v1069, 0
        %v1229 = vsel %vm676, %v1006, 0
        %1231 = vmatprep.subr.mxu0 0.0
        %1232 = vmatpush1.xpose.msra.mxu0 %v1229
        %1233 = vmatprep.subr.mxu0 0.0
        %1234 = vmatpush1.xpose.msra.mxu0 0.0
        %1235 = vmatprep.subr.mxu0 0.0
        %1236 = vmatpush1.xpose.msra.mxu0 0.0
        %1237 = vmatprep.subr.mxu0 0.0
        %1238 = vmatpush1.xpose.msra.mxu0 0.0
        %1239 = vmatprep.subr.mxu0 0.0
        %1240 = vmatpush1.xpose.msra.mxu0 0.0
        %1241 = vmatprep.subr.mxu0 0.0
        %1242 = vmatpush1.xpose.msra.mxu0 0.0
        %1243 = vmatprep.subr.mxu0 0.0
        %1244 = vmatpush1.xpose.msra.mxu0 0.0
        %1245 = vmatprep.subr.mxu0 0.0
        %1246 = vmatpush1.xpose.msra.mxu0 0.0
        %1247 = vmatprep.subr.mxu0 0.0
        %1248 = vmatpush1.xpose.msra.mxu0 0.0
        %1249 = vmatprep.subr.mxu0 0.0
        %1250 = vmatpush1.xpose.msra.mxu0 0.0
        %1251 = vmatprep.subr.mxu0 0.0
        %1252 = vmatpush1.xpose.msra.mxu0 0.0
        %1253 = vmatprep.subr.mxu0 0.0
        %1254 = vmatpush1.xpose.msra.mxu0 0.0
        %1255 = vmatprep.subr.mxu0 0.0
        %1256 = vmatpush1.xpose.msra.mxu0 0.0
        %1257 = vmatprep.subr.mxu0 0.0
        %1258 = vmatpush1.xpose.msra.mxu0 0.0
        %1259 = vmatprep.subr.mxu0 0.0
        %1260 = vmatpush1.xpose.msra.mxu0 0.0
        %1261 = vmatprep.subr.mxu0 0.0
        %1262 = vmatpush1.xpose.msra.mxu0 0.0
        %1263 = vmatprep.subr.mxu0 0.0
        %1264 = vmatpush1.xpose.msra.mxu0 0.0
        %1265 = vmatprep.subr.mxu0 0.0
        %1266 = vmatpush1.xpose.msra.mxu0 0.0
        %1267 = vmatprep.subr.mxu0 0.0
        %1268 = vmatpush1.xpose.msra.mxu0 0.0
        %1269 = vmatprep.subr.mxu0 0.0
        %1270 = vmatpush1.xpose.msra.mxu0 0.0
        %1271 = vmatprep.subr.mxu0 0.0
        %1272 = vmatpush1.xpose.msra.mxu0 0.0
        %1273 = vmatprep.subr.mxu0 0.0
        %1274 = vmatpush1.xpose.msra.mxu0 0.0
        %1275 = vmatprep.subr.mxu0 0.0
        %1276 = vmatpush1.xpose.msra.mxu0 0.0
        %1277 = vmatprep.subr.mxu0 0.0
        %1278 = vmatpush1.xpose.msra.mxu0 0.0
        %1279 = vmatprep.subr.mxu0 0.0
        %1280 = vmatpush1.xpose.msra.mxu0 0.0
        %1281 = vmatprep.subr.mxu0 0.0
        %1282 = vmatpush1.xpose.msra.mxu0 0.0
        %1283 = vmatprep.subr.mxu0 0.0
        %1284 = vmatpush1.xpose.msra.mxu0 0.0
        %1285 = vmatprep.subr.mxu0 0.0
        %1286 = vmatpush1.xpose.msra.mxu0 0.0
        %1287 = vmatprep.subr.mxu0 0.0
        %1288 = vmatpush1.xpose.msra.mxu0 0.0
        %1289 = vmatprep.subr.mxu0 0.0
        %1290 = vmatpush1.xpose.msra.mxu0 0.0
        %1291 = vmatprep.subr.mxu0 0.0
        %1292 = vmatpush1.xpose.msra.mxu0 0.0
        %1293 = vmatprep.subr.mxu0 0.0
        %1294 = vmatpush1.xpose.msra.mxu0 0.0
        %1295 = vmatprep.mubr.f32.mxu0 0.0
        %1296 = vmatmul.mubr.f32.gmra.mrb[0].mxu0 %v1226
        %v1297 = vpop.f32.mrb[0].mxu0
        %v1298 = vadd.f32 0.0, %v1297
        %v1299 = vpop.f32.mrb[0].mxu0
        %1300 = vdwg.mxu0
        %v1302 = vsel %vm676, %v1101, 0
        %v1305 = vsel %vm676, %v1007, 0
        %1307 = vmatprep.subr.mxu0 0.0
        %1308 = vmatpush1.xpose.msra.mxu0 %v1305
        %1309 = vmatprep.subr.mxu0 0.0
        %1310 = vmatpush1.xpose.msra.mxu0 0.0
        %1311 = vmatprep.subr.mxu0 0.0
        %1312 = vmatpush1.xpose.msra.mxu0 0.0
        %1313 = vmatprep.subr.mxu0 0.0
        %1314 = vmatpush1.xpose.msra.mxu0 0.0
        %1315 = vmatprep.subr.mxu0 0.0
        %1316 = vmatpush1.xpose.msra.mxu0 0.0
        %1317 = vmatprep.subr.mxu0 0.0
        %1318 = vmatpush1.xpose.msra.mxu0 0.0
        %1319 = vmatprep.subr.mxu0 0.0
        %1320 = vmatpush1.xpose.msra.mxu0 0.0
        %1321 = vmatprep.subr.mxu0 0.0
        %1322 = vmatpush1.xpose.msra.mxu0 0.0
        %1323 = vmatprep.subr.mxu0 0.0
        %1324 = vmatpush1.xpose.msra.mxu0 0.0
        %1325 = vmatprep.subr.mxu0 0.0
        %1326 = vmatpush1.xpose.msra.mxu0 0.0
        %1327 = vmatprep.subr.mxu0 0.0
        %1328 = vmatpush1.xpose.msra.mxu0 0.0
        %1329 = vmatprep.subr.mxu0 0.0
        %1330 = vmatpush1.xpose.msra.mxu0 0.0
        %1331 = vmatprep.subr.mxu0 0.0
        %1332 = vmatpush1.xpose.msra.mxu0 0.0
        %1333 = vmatprep.subr.mxu0 0.0
        %1334 = vmatpush1.xpose.msra.mxu0 0.0
        %1335 = vmatprep.subr.mxu0 0.0
        %1336 = vmatpush1.xpose.msra.mxu0 0.0
        %1337 = vmatprep.subr.mxu0 0.0
        %1338 = vmatpush1.xpose.msra.mxu0 0.0
        %1339 = vmatprep.subr.mxu0 0.0
        %1340 = vmatpush1.xpose.msra.mxu0 0.0
        %1341 = vmatprep.subr.mxu0 0.0
        %1342 = vmatpush1.xpose.msra.mxu0 0.0
        %1343 = vmatprep.subr.mxu0 0.0
        %1344 = vmatpush1.xpose.msra.mxu0 0.0
        %1345 = vmatprep.subr.mxu0 0.0
        %1346 = vmatpush1.xpose.msra.mxu0 0.0
        %1347 = vmatprep.subr.mxu0 0.0
        %1348 = vmatpush1.xpose.msra.mxu0 0.0
        %1349 = vmatprep.subr.mxu0 0.0
        %1350 = vmatpush1.xpose.msra.mxu0 0.0
        %1351 = vmatprep.subr.mxu0 0.0
        %1352 = vmatpush1.xpose.msra.mxu0 0.0
        %1353 = vmatprep.subr.mxu0 0.0
        %1354 = vmatpush1.xpose.msra.mxu0 0.0
        %1355 = vmatprep.subr.mxu0 0.0
        %1356 = vmatpush1.xpose.msra.mxu0 0.0
        %1357 = vmatprep.subr.mxu0 0.0
        %1358 = vmatpush1.xpose.msra.mxu0 0.0
        %1359 = vmatprep.subr.mxu0 0.0
        %1360 = vmatpush1.xpose.msra.mxu0 0.0
        %1361 = vmatprep.subr.mxu0 0.0
        %1362 = vmatpush1.xpose.msra.mxu0 0.0
        %1363 = vmatprep.subr.mxu0 0.0
        %1364 = vmatpush1.xpose.msra.mxu0 0.0
        %1365 = vmatprep.subr.mxu0 0.0
        %1366 = vmatpush1.xpose.msra.mxu0 0.0
        %1367 = vmatprep.subr.mxu0 0.0
        %1368 = vmatpush1.xpose.msra.mxu0 0.0
        %1369 = vmatprep.subr.mxu0 0.0
        %1370 = vmatpush1.xpose.msra.mxu0 0.0
        %1371 = vmatprep.mubr.f32.mxu0 0.0
        %1372 = vmatmul.mubr.f32.gmra.mrb[0].mxu0 %v1302
        %v1373 = vpop.f32.mrb[0].mxu0
        %v1374 = vadd.f32 0.0, %v1373
        %v1375 = vpop.f32.mrb[0].mxu0
        %1376 = vdwg.mxu0
        %v1378 = vsel %vm676, %v1133, 0
        %v1381 = vsel %vm676, %v1008, 0
        %1383 = vmatprep.subr.mxu0 0.0
        %1384 = vmatpush1.xpose.msra.mxu0 %v1381
        %1385 = vmatprep.subr.mxu0 0.0
        %1386 = vmatpush1.xpose.msra.mxu0 0.0
        %1387 = vmatprep.subr.mxu0 0.0
        %1388 = vmatpush1.xpose.msra.mxu0 0.0
        %1389 = vmatprep.subr.mxu0 0.0
        %1390 = vmatpush1.xpose.msra.mxu0 0.0
        %1391 = vmatprep.subr.mxu0 0.0
        %1392 = vmatpush1.xpose.msra.mxu0 0.0
        %1393 = vmatprep.subr.mxu0 0.0
        %1394 = vmatpush1.xpose.msra.mxu0 0.0
        %1395 = vmatprep.subr.mxu0 0.0
        %1396 = vmatpush1.xpose.msra.mxu0 0.0
        %1397 = vmatprep.subr.mxu0 0.0
        %1398 = vmatpush1.xpose.msra.mxu0 0.0
        %1399 = vmatprep.subr.mxu0 0.0
        %1400 = vmatpush1.xpose.msra.mxu0 0.0
        %1401 = vmatprep.subr.mxu0 0.0
        %1402 = vmatpush1.xpose.msra.mxu0 0.0
        %1403 = vmatprep.subr.mxu0 0.0
        %1404 = vmatpush1.xpose.msra.mxu0 0.0
        %1405 = vmatprep.subr.mxu0 0.0
        %1406 = vmatpush1.xpose.msra.mxu0 0.0
        %1407 = vmatprep.subr.mxu0 0.0
        %1408 = vmatpush1.xpose.msra.mxu0 0.0
        %1409 = vmatprep.subr.mxu0 0.0
        %1410 = vmatpush1.xpose.msra.mxu0 0.0
        %1411 = vmatprep.subr.mxu0 0.0
        %1412 = vmatpush1.xpose.msra.mxu0 0.0
        %1413 = vmatprep.subr.mxu0 0.0
        %1414 = vmatpush1.xpose.msra.mxu0 0.0
        %1415 = vmatprep.subr.mxu0 0.0
        %1416 = vmatpush1.xpose.msra.mxu0 0.0
        %1417 = vmatprep.subr.mxu0 0.0
        %1418 = vmatpush1.xpose.msra.mxu0 0.0
        %1419 = vmatprep.subr.mxu0 0.0
        %1420 = vmatpush1.xpose.msra.mxu0 0.0
        %1421 = vmatprep.subr.mxu0 0.0
        %1422 = vmatpush1.xpose.msra.mxu0 0.0
        %1423 = vmatprep.subr.mxu0 0.0
        %1424 = vmatpush1.xpose.msra.mxu0 0.0
        %1425 = vmatprep.subr.mxu0 0.0
        %1426 = vmatpush1.xpose.msra.mxu0 0.0
        %1427 = vmatprep.subr.mxu0 0.0
        %1428 = vmatpush1.xpose.msra.mxu0 0.0
        %1429 = vmatprep.subr.mxu0 0.0
        %1430 = vmatpush1.xpose.msra.mxu0 0.0
        %1431 = vmatprep.subr.mxu0 0.0
        %1432 = vmatpush1.xpose.msra.mxu0 0.0
        %1433 = vmatprep.subr.mxu0 0.0
        %1434 = vmatpush1.xpose.msra.mxu0 0.0
        %1435 = vmatprep.subr.mxu0 0.0
        %1436 = vmatpush1.xpose.msra.mxu0 0.0
        %1437 = vmatprep.subr.mxu0 0.0
        %1438 = vmatpush1.xpose.msra.mxu0 0.0
        %1439 = vmatprep.subr.mxu0 0.0
        %1440 = vmatpush1.xpose.msra.mxu0 0.0
        %1441 = vmatprep.subr.mxu0 0.0
        %1442 = vmatpush1.xpose.msra.mxu0 0.0
        %1443 = vmatprep.subr.mxu0 0.0
        %1444 = vmatpush1.xpose.msra.mxu0 0.0
        %1445 = vmatprep.subr.mxu0 0.0
        %1446 = vmatpush1.xpose.msra.mxu0 0.0
        %1447 = vmatprep.mubr.f32.mxu0 0.0
        %1448 = vmatmul.mubr.f32.gmra.mrb[0].mxu0 %v1378
        %v1449 = vpop.f32.mrb[0].mxu0
        %v1450 = vadd.f32 0.0, %v1449
        %v1451 = vpop.f32.mrb[0].mxu0
        %1452 = vdwg.mxu0
        %1453 = vxpose.xlu0.b32.start [1/16] %v1222, 128
        %1454 = vxpose.xlu0.b32.cont [2/16] 0.0, 128
        %1455 = vxpose.xlu0.b32.cont [3/16] 0.0, 128
        %1456 = vxpose.xlu0.b32.cont [4/16] 0.0, 128
        %1457 = vxpose.xlu0.b32.cont [5/16] 0.0, 128
        %1458 = vxpose.xlu0.b32.cont [6/16] 0.0, 128
        %1459 = vxpose.xlu0.b32.cont [7/16] 0.0, 128
        %1460 = vxpose.xlu0.b32.cont [8/16] 0.0, 128
        %1461 = vxpose.xlu0.b32.cont [9/16] 0.0, 128
        %1462 = vxpose.xlu0.b32.cont [10/16] 0.0, 128
        %1463 = vxpose.xlu0.b32.cont [11/16] 0.0, 128
        %1464 = vxpose.xlu0.b32.cont [12/16] 0.0, 128
        %1465 = vxpose.xlu0.b32.cont [13/16] 0.0, 128
        %1466 = vxpose.xlu0.b32.cont [14/16] 0.0, 128
        %1467 = vxpose.xlu0.b32.cont [15/16] 0.0, 128
        %1468 = vxpose.xlu0.b32.end [16/16] 0.0, 128
        %v1469 = vpop.trf.xlu0
        %v1470 = vpop.trf.xlu0
        %v1471 = vpop.trf.xlu0
        %v1472 = vpop.trf.xlu0
        %v1473 = vpop.trf.xlu0
        %v1474 = vpop.trf.xlu0
        %v1475 = vpop.trf.xlu0
        %v1476 = vpop.trf.xlu0
        %v1477 = vpop.trf.xlu0
        %v1478 = vpop.trf.xlu0
        %v1479 = vpop.trf.xlu0
        %v1480 = vpop.trf.xlu0
        %v1481 = vpop.trf.xlu0
        %v1482 = vpop.trf.xlu0
        %v1483 = vpop.trf.xlu0
        %v1484 = vpop.trf.xlu0
        %1485 = vxpose.xlu0.b32.start [1/16] %v1298, 128
        %1486 = vxpose.xlu0.b32.cont [2/16] 0.0, 128
        %1487 = vxpose.xlu0.b32.cont [3/16] 0.0, 128
        %1488 = vxpose.xlu0.b32.cont [4/16] 0.0, 128
        %1489 = vxpose.xlu0.b32.cont [5/16] 0.0, 128
        %1490 = vxpose.xlu0.b32.cont [6/16] 0.0, 128
        %1491 = vxpose.xlu0.b32.cont [7/16] 0.0, 128
        %1492 = vxpose.xlu0.b32.cont [8/16] 0.0, 128
        %1493 = vxpose.xlu0.b32.cont [9/16] 0.0, 128
        %1494 = vxpose.xlu0.b32.cont [10/16] 0.0, 128
        %1495 = vxpose.xlu0.b32.cont [11/16] 0.0, 128
        %1496 = vxpose.xlu0.b32.cont [12/16] 0.0, 128
        %1497 = vxpose.xlu0.b32.cont [13/16] 0.0, 128
        %1498 = vxpose.xlu0.b32.cont [14/16] 0.0, 128
        %1499 = vxpose.xlu0.b32.cont [15/16] 0.0, 128
        %1500 = vxpose.xlu0.b32.end [16/16] 0.0, 128
        %v1501 = vpop.trf.xlu0
        %v1502 = vpop.trf.xlu0
        %v1503 = vpop.trf.xlu0
        %v1504 = vpop.trf.xlu0
        %v1505 = vpop.trf.xlu0
        %v1506 = vpop.trf.xlu0
        %v1507 = vpop.trf.xlu0
        %v1508 = vpop.trf.xlu0
        %v1509 = vpop.trf.xlu0
        %v1510 = vpop.trf.xlu0
        %v1511 = vpop.trf.xlu0
        %v1512 = vpop.trf.xlu0
        %v1513 = vpop.trf.xlu0
        %v1514 = vpop.trf.xlu0
        %v1515 = vpop.trf.xlu0
        %v1516 = vpop.trf.xlu0
        %1517 = vxpose.xlu0.b32.start [1/16] %v1374, 128
        %1518 = vxpose.xlu0.b32.cont [2/16] 0.0, 128
        %1519 = vxpose.xlu0.b32.cont [3/16] 0.0, 128
        %1520 = vxpose.xlu0.b32.cont [4/16] 0.0, 128
        %1521 = vxpose.xlu0.b32.cont [5/16] 0.0, 128
        %1522 = vxpose.xlu0.b32.cont [6/16] 0.0, 128
        %1523 = vxpose.xlu0.b32.cont [7/16] 0.0, 128
        %1524 = vxpose.xlu0.b32.cont [8/16] 0.0, 128
        %1525 = vxpose.xlu0.b32.cont [9/16] 0.0, 128
        %1526 = vxpose.xlu0.b32.cont [10/16] 0.0, 128
        %1527 = vxpose.xlu0.b32.cont [11/16] 0.0, 128
        %1528 = vxpose.xlu0.b32.cont [12/16] 0.0, 128
        %1529 = vxpose.xlu0.b32.cont [13/16] 0.0, 128
        %1530 = vxpose.xlu0.b32.cont [14/16] 0.0, 128
        %1531 = vxpose.xlu0.b32.cont [15/16] 0.0, 128
        %1532 = vxpose.xlu0.b32.end [16/16] 0.0, 128
        %v1533 = vpop.trf.xlu0
        %v1534 = vpop.trf.xlu0
        %v1535 = vpop.trf.xlu0
        %v1536 = vpop.trf.xlu0
        %v1537 = vpop.trf.xlu0
        %v1538 = vpop.trf.xlu0
        %v1539 = vpop.trf.xlu0
        %v1540 = vpop.trf.xlu0
        %v1541 = vpop.trf.xlu0
        %v1542 = vpop.trf.xlu0
        %v1543 = vpop.trf.xlu0
        %v1544 = vpop.trf.xlu0
        %v1545 = vpop.trf.xlu0
        %v1546 = vpop.trf.xlu0
        %v1547 = vpop.trf.xlu0
        %v1548 = vpop.trf.xlu0
        %1549 = vxpose.xlu0.b32.start [1/16] %v1450, 128
        %1550 = vxpose.xlu0.b32.cont [2/16] 0.0, 128
        %1551 = vxpose.xlu0.b32.cont [3/16] 0.0, 128
        %1552 = vxpose.xlu0.b32.cont [4/16] 0.0, 128
        %1553 = vxpose.xlu0.b32.cont [5/16] 0.0, 128
        %1554 = vxpose.xlu0.b32.cont [6/16] 0.0, 128
        %1555 = vxpose.xlu0.b32.cont [7/16] 0.0, 128
        %1556 = vxpose.xlu0.b32.cont [8/16] 0.0, 128
        %1557 = vxpose.xlu0.b32.cont [9/16] 0.0, 128
        %1558 = vxpose.xlu0.b32.cont [10/16] 0.0, 128
        %1559 = vxpose.xlu0.b32.cont [11/16] 0.0, 128
        %1560 = vxpose.xlu0.b32.cont [12/16] 0.0, 128
        %1561 = vxpose.xlu0.b32.cont [13/16] 0.0, 128
        %1562 = vxpose.xlu0.b32.cont [14/16] 0.0, 128
        %1563 = vxpose.xlu0.b32.cont [15/16] 0.0, 128
        %1564 = vxpose.xlu0.b32.end [16/16] 0.0, 128
        %v1565 = vpop.trf.xlu0
        %v1566 = vpop.trf.xlu0
        %v1567 = vpop.trf.xlu0
        %v1568 = vpop.trf.xlu0
        %v1569 = vpop.trf.xlu0
        %v1570 = vpop.trf.xlu0
        %v1571 = vpop.trf.xlu0
        %v1572 = vpop.trf.xlu0
        %v1573 = vpop.trf.xlu0
        %v1574 = vpop.trf.xlu0
        %v1575 = vpop.trf.xlu0
        %v1576 = vpop.trf.xlu0
        %v1577 = vpop.trf.xlu0
        %v1578 = vpop.trf.xlu0
        %v1579 = vpop.trf.xlu0
        %v1580 = vpop.trf.xlu0
        %v1581 = vcombine.low %v1469, %v1533
        %v1582 = vcombine.high %v1469, %v1533
        %v1584 = vunpack.c.l.s4 1983009808
        %v1585 = vunpack.c.0.s8 %v1584
        %v1586 = vlaneseq
        %v1587 = vshrl.u32 %v1586, 7
        %v1588 = vsub.s32 %v1585, %v1587
        %v1589 = vrot.slane %v1581, %v1588
        %v1591 = vunpack.c.l.s4 1983009808
        %v1592 = vunpack.c.0.s8 %v1591
        %v1593 = vlaneseq
        %v1594 = vshrl.u32 %v1593, 7
        %v1595 = vsub.s32 %v1592, %v1594
        %v1596 = vrot.slane %v1582, %v1595
        %v1597 = vcombine.low %v1501, %v1565
        %v1598 = vcombine.high %v1501, %v1565
        %v1600 = vunpack.c.l.s4 1983009808
        %v1601 = vunpack.c.0.s8 %v1600
        %v1602 = vlaneseq
        %v1603 = vshrl.u32 %v1602, 7
        %v1604 = vsub.s32 %v1601, %v1603
        %v1605 = vrot.slane %v1597, %v1604
        %v1607 = vunpack.c.l.s4 1983009808
        %v1608 = vunpack.c.0.s8 %v1607
        %v1609 = vlaneseq
        %v1610 = vshrl.u32 %v1609, 7
        %v1611 = vsub.s32 %v1608, %v1610
        %v1612 = vrot.slane %v1598, %v1611
        %v1613 = vcombine.low %v1589, %v1605
        %v1614 = vcombine.high %v1589, %v1605
        %v1616 = vunpack.c.l.s4 1934713408
        %v1617 = vunpack.c.0.s8 %v1616
        %v1618 = vlaneseq
        %v1619 = vshrl.u32 %v1618, 7
        %v1620 = vsub.s32 %v1617, %v1619
        %v1621 = vrot.slane %v1613, %v1620
        %v1623 = vunpack.c.l.s4 1934713408
        %v1624 = vunpack.c.0.s8 %v1623
        %v1625 = vlaneseq
        %v1626 = vshrl.u32 %v1625, 7
        %v1627 = vsub.s32 %v1624, %v1626
        %v1628 = vrot.slane %v1614, %v1627
        %v1629 = vcombine.low %v1596, %v1612
        %v1630 = vcombine.high %v1596, %v1612
        %v1632 = vunpack.c.l.s4 1934713408
        %v1633 = vunpack.c.0.s8 %v1632
        %v1634 = vlaneseq
        %v1635 = vshrl.u32 %v1634, 7
        %v1636 = vsub.s32 %v1633, %v1635
        %v1637 = vrot.slane %v1629, %v1636
        %v1639 = vunpack.c.l.s4 1934713408
        %v1640 = vunpack.c.0.s8 %v1639
        %v1641 = vlaneseq
        %v1642 = vshrl.u32 %v1641, 7
        %v1643 = vsub.s32 %v1640, %v1642
        %v1644 = vrot.slane %v1630, %v1643
        %v1645 = vcombine.high %v1621, 0.0
        %v1646 = vcombine.high %v1628, 0.0
        %v1647 = vcombine.high %v1637, 0.0
        %v1648 = vcombine.high %v1644, 0.0
        %v1649 = vcombine.low %v1621, %v1628
        %v1651 = vunpack.c.l.s4 1983009808
        %v1652 = vunpack.c.0.s8 %v1651
        %v1653 = vlaneseq
        %v1654 = vshrl.u32 %v1653, 7
        %v1655 = vsub.s32 %v1652, %v1654
        %v1656 = vrot.slane %v1649, %v1655
        %v1657 = vcombine.low %v1645, %v1646
        %v1659 = vunpack.c.l.s4 1983009808
        %v1660 = vunpack.c.0.s8 %v1659
        %v1661 = vlaneseq
        %v1662 = vshrl.u32 %v1661, 7
        %v1663 = vsub.s32 %v1660, %v1662
        %v1664 = vrot.slane %v1657, %v1663
        %v1665 = vcombine.low %v1637, %v1644
        %v1667 = vunpack.c.l.s4 1983009808
        %v1668 = vunpack.c.0.s8 %v1667
        %v1669 = vlaneseq
        %v1670 = vshrl.u32 %v1669, 7
        %v1671 = vsub.s32 %v1668, %v1670
        %v1672 = vrot.slane %v1665, %v1671
        %v1673 = vcombine.low %v1647, %v1648
        %v1675 = vunpack.c.l.s4 1983009808
        %v1676 = vunpack.c.0.s8 %v1675
        %v1677 = vlaneseq
        %v1678 = vshrl.u32 %v1677, 7
        %v1679 = vsub.s32 %v1676, %v1678
        %v1680 = vrot.slane %v1673, %v1679
        %v1681 = vcombine.low %v1656, %v1664
        %v1682 = vcombine.high %v1656, %v1664
        %v1684 = vunpack.c.l.s4 1934713408
        %v1685 = vunpack.c.0.s8 %v1684
        %v1686 = vlaneseq
        %v1687 = vshrl.u32 %v1686, 7
        %v1688 = vsub.s32 %v1685, %v1687
        %v1689 = vrot.slane %v1681, %v1688
        %v1691 = vunpack.c.l.s4 1934713408
        %v1692 = vunpack.c.0.s8 %v1691
        %v1693 = vlaneseq
        %v1694 = vshrl.u32 %v1693, 7
        %v1695 = vsub.s32 %v1692, %v1694
        %v1696 = vrot.slane %v1682, %v1695
        %v1697 = vcombine.low %v1672, %v1680
        %v1698 = vcombine.high %v1672, %v1680
        %v1700 = vunpack.c.l.s4 1934713408
        %v1701 = vunpack.c.0.s8 %v1700
        %v1702 = vlaneseq
        %v1703 = vshrl.u32 %v1702, 7
        %v1704 = vsub.s32 %v1701, %v1703
        %v1705 = vrot.slane %v1697, %v1704
        %v1707 = vunpack.c.l.s4 1934713408
        %v1708 = vunpack.c.0.s8 %v1707
        %v1709 = vlaneseq
        %v1710 = vshrl.u32 %v1709, 7
        %v1711 = vsub.s32 %v1708, %v1710
        %v1712 = vrot.slane %v1698, %v1711
        %v1713 = vcombine.low %v1689, %v1705
        %v1714 = vcombine.high %v1689, %v1705
        %v1715 = vcombine.low %v1696, %v1712
        %v1716 = vcombine.high %v1696, %v1712
        %1718 = vrot.lane.b32.xlu0 %v1714, 8
        %v1719 = vpop.permute.xlu0 %1718
        %1722 = vrot.lane.b32.xlu0 %v1715, 16
        %v1723 = vpop.permute.xlu0 %1722
        %1726 = vrot.lane.b32.xlu0 %v1716, 24
        %v1727 = vpop.permute.xlu0 %1726
        %v1729 = vsel %vm676, %v1713, %v1719
        %vm1730 = vcmask 130048
        %v1731 = vsel %vm1730, %v1729, %v1723
        %vm1732 = vcmask 195584
        %v1733 = vsel %vm1732, %v1731, %v1727
        %v1734 = vld [vmem:[#allocation9] sm:$0xff]
        %v1735 = vld [vmem:[#allocation9 + $0x8] sm:$0xff]
        %v1736 = vld [vmem:[#allocation9 + $0x10] sm:$0xff]
        %v1737 = vld [vmem:[#allocation9 + $0x18] sm:$0xff]
        %v1739 = vsel %vm448, %v1733, 0
        %1741 = vmatprep.subr.mxu0 0.0
        %1742 = vmatpush1.msra.mxu0 %v1734
        %1743 = vmatprep.subr.mxu0 0.0
        %1744 = vmatpush1.msra.mxu0 %v1735
        %1745 = vmatprep.subr.mxu0 0.0
        %1746 = vmatpush1.msra.mxu0 %v1736
        %1747 = vmatprep.subr.mxu0 0.0
        %1748 = vmatpush1.msra.mxu0 %v1737
        %1749 = vmatprep.subr.mxu0 0.0
        %1750 = vmatpush1.msra.mxu0 0.0
        %1751 = vmatprep.subr.mxu0 0.0
        %1752 = vmatpush1.msra.mxu0 0.0
        %1753 = vmatprep.subr.mxu0 0.0
        %1754 = vmatpush1.msra.mxu0 0.0
        %1755 = vmatprep.subr.mxu0 0.0
        %1756 = vmatpush1.msra.mxu0 0.0
        %1757 = vmatprep.subr.mxu0 0.0
        %1758 = vmatpush1.msra.mxu0 0.0
        %1759 = vmatprep.subr.mxu0 0.0
        %1760 = vmatpush1.msra.mxu0 0.0
        %1761 = vmatprep.subr.mxu0 0.0
        %1762 = vmatpush1.msra.mxu0 0.0
        %1763 = vmatprep.subr.mxu0 0.0
        %1764 = vmatpush1.msra.mxu0 0.0
        %1765 = vmatprep.subr.mxu0 0.0
        %1766 = vmatpush1.msra.mxu0 0.0
        %1767 = vmatprep.subr.mxu0 0.0
        %1768 = vmatpush1.msra.mxu0 0.0
        %1769 = vmatprep.subr.mxu0 0.0
        %1770 = vmatpush1.msra.mxu0 0.0
        %1771 = vmatprep.subr.mxu0 0.0
        %1772 = vmatpush1.msra.mxu0 0.0
        %1773 = vmatprep.subr.mxu0 0.0
        %1774 = vmatpush1.msra.mxu0 0.0
        %1775 = vmatprep.subr.mxu0 0.0
        %1776 = vmatpush1.msra.mxu0 0.0
        %1777 = vmatprep.subr.mxu0 0.0
        %1778 = vmatpush1.msra.mxu0 0.0
        %1779 = vmatprep.subr.mxu0 0.0
        %1780 = vmatpush1.msra.mxu0 0.0
        %1781 = vmatprep.subr.mxu0 0.0
        %1782 = vmatpush1.msra.mxu0 0.0
        %1783 = vmatprep.subr.mxu0 0.0
        %1784 = vmatpush1.msra.mxu0 0.0
        %1785 = vmatprep.subr.mxu0 0.0
        %1786 = vmatpush1.msra.mxu0 0.0
        %1787 = vmatprep.subr.mxu0 0.0
        %1788 = vmatpush1.msra.mxu0 0.0
        %1789 = vmatprep.subr.mxu0 0.0
        %1790 = vmatpush1.msra.mxu0 0.0
        %1791 = vmatprep.subr.mxu0 0.0
        %1792 = vmatpush1.msra.mxu0 0.0
        %1793 = vmatprep.subr.mxu0 0.0
        %1794 = vmatpush1.msra.mxu0 0.0
        %1795 = vmatprep.subr.mxu0 0.0
        %1796 = vmatpush1.msra.mxu0 0.0
        %1797 = vmatprep.subr.mxu0 0.0
        %1798 = vmatpush1.msra.mxu0 0.0
        %1799 = vmatprep.subr.mxu0 0.0
        %1800 = vmatpush1.msra.mxu0 0.0
        %1801 = vmatprep.subr.mxu0 0.0
        %1802 = vmatpush1.msra.mxu0 0.0
        %1803 = vmatprep.subr.mxu0 0.0
        %1804 = vmatpush1.msra.mxu0 0.0
        %1805 = vmatprep.mubr.f32.mxu0 0.0
        %1806 = vmatmul.mubr.f32.gmra.mrb[0].mxu0 %v1739
        %v1807 = vpop.f32.mrb[0].mxu0
        %v1808 = vadd.f32 0.0, %v1807
        %v1809 = vpop.f32.mrb[0].mxu0
        %1810 = vdwg.mxu0
        %v1811 = vadd.f32 %v529, %v1808
        %1812 = vst.msk [vmem:[%s310] sm:$0xff] %vm448, %v1811
        %s1813 = sand.u32 %s178, 1
        %s1814 = scalar_lea.sflag [#allocation6], %s1813
        %s1815 = sand.u32 %s178, 1
        %s1816 = smul.addr %s1815, 8
        %s1817 = scalar_lea.vmem [#allocation10], %s1816
        // Predicated region
        $region67: #{tpu_custom_call.1} parent=43 // pred_check
          %p1818 = pneg %p188
        $region68: #{tpu_custom_call.1} parent=43 // pred_check_branch
          %1820 = sbr.rel (%p1818) target = $region70
        $region69: #{tpu_custom_call.1} parent=43 // pred_region
          %s1822 = ssub.s32 128, 128
          %1823 = vsyncadd %s1814, %s1822
          %s1824 = sadd.s32 %s30, %s29
          %s1825 = smul.addr %s1824, 128
          %s1826 = scalar_lea.hbm %s7, %s1825
          %s1828 = sshll.u32 %s1817, 4
          %s1829 = int_to_ptr.vmem [resolvable:$true] %s1828
          %1831 = dma.vmem_to_hbm [thread:$0]  %s1829, 128, %s1826, %s1814
        $region70: #{tpu_custom_call.1} parent=43 // pred_fallthru
          _
      $region44: #{tpu_custom_call.1} parent=5 // pred_fallthru
        _
      %p1832 = scmp.le.s32.totalorder 2, %s20
      // Predicated region
      $region71: #{tpu_custom_call.1} parent=5 // pred_check
        %p1833 = pneg %p1832
      $region72: #{tpu_custom_call.1} parent=5 // pred_check_branch
        %1835 = sbr.rel (%p1833) target = $region74
      $region73: #{tpu_custom_call.1} parent=5 // pred_region
        %s1836 = ssub.s32 %s20, 2
        // Predicated region
        $region75: #{tpu_custom_call.1} parent=73 // pred_check
          %p1837 = pneg %p194
        $region76: #{tpu_custom_call.1} parent=73 // pred_check_branch
          %1839 = sbr.rel (%p1837) target = $region78
        $region77: #{tpu_custom_call.1} parent=73 // pred_region
          %s1840 = sand.u32 %s179, 1
          %s1841 = scalar_lea.sflag [#allocation6], %s1840
          %s1842 = sand.u32 %s179, 1
          %s1843 = smul.addr %s1842, 8
          %s1844 = scalar_lea.vmem [#allocation10], %s1843
          %1845 = dma.done %s1841, 128
        $region78: #{tpu_custom_call.1} parent=73 // pred_fallthru
          _
      $region74: #{tpu_custom_call.1} parent=5 // pred_fallthru
        _
    $region6: #{tpu_custom_call.1} parent=1 // loop_footer
      %s24 = sadd.s32 1, %s20
    $region7: #{tpu_custom_call.1} parent=1 // loop_footer_branch
      %19 = sbr.rel target = $region3
    $region8: #{tpu_custom_call.1} parent=1 // loop_exit
      _
    %1846 = vsyncpa [#allocation5], 1
    %s1847 = scalar_lea.sflag [#allocation5], 1
    %1848 = vsyncpa %s1847, 1
    %1849 = vsyncpa [#allocation8], 1
    %1850 = vsyncpa [#allocation6], 1
    %s1851 = scalar_lea.sflag [#allocation6], 1
    %1852 = vsyncpa %s1851, 1

</llo_original>
